<compile_context>
chip_gen: v7x
topology: tpu7x:2x2x1
jax: 0.10.0
libtpu: 0.0.40
codegen_flags: <defaults>
</compile_context>

<pallas_src>
import functools

import jax
import jax.numpy as jnp
from jax.experimental import pallas as pl
from jax.experimental.pallas import tpu as pltpu


# ---------------------------------------------------------------------------
# Fused Pallas kernel: the whole BasicBlock for one image per grid step.
# ---------------------------------------------------------------------------

def _basic_block_kernel(x_ref, s1_ref, b1_ref, w1t_ref, s2_ref, b2_ref, w2t_ref,
                        *rest, stride, equal_in_out, H, Ho, Wo, Cout):
    """Refs:
      x_ref   : (1, H, W*Cin)   f32   input image, lane-packed NHWC
      s1/b1   : (1, W*Cin)      f32   bn1 scale/bias, tiled across W
      w1t_ref : (3, W*Cin, Wo*Cout) bf16  Toeplitz-expanded conv1 weights (one per row-tap)
      s2/b2   : (1, Wo*Cout)    f32   bn2 scale/bias, tiled across Wo
      w2t_ref : (3, Wo*Cout, Wo*Cout) bf16 Toeplitz-expanded conv2 weights
      [wsct_ref: (W*Cin, Wo*Cout) bf16 Toeplitz-expanded 1x1 shortcut weights]
      o_ref   : (1, Ho, Wo*Cout) f32  output, lane-packed NHWC
    """
    if equal_in_out:
        (o_ref,) = rest
        wsct_ref = None
    else:
        wsct_ref, o_ref = rest

    WoC = Wo * Cout

    # ---- bn1 + relu1 (VPU, f32) -------------------------------------------------
    x = x_ref[0]                                                  # (H, W*Cin) f32
    a = jnp.maximum(x * s1_ref[...] + b1_ref[...], 0.0)          # f32
    a_bf = a.astype(jnp.bfloat16)                                 # MXU operand

    # Exact 0/1 row-gather via MXU: selects input row  r = out_row*stride + ky - pad.
    # Out-of-range rows produce an all-zero selection row == zero padding.
    def row_select(src_bf, n_out, n_in, s, ky):
        out_idx = jax.lax.broadcasted_iota(jnp.int32, (n_out, n_in), 0)
        in_idx = jax.lax.broadcasted_iota(jnp.int32, (n_out, n_in), 1)
        sel = jnp.where(in_idx == out_idx * s + (ky - 1), 1.0, 0.0).astype(jnp.bfloat16)
        rows = jnp.dot(sel, src_bf, preferred_element_type=jnp.float32)
        return rows.astype(jnp.bfloat16)                          # exact (0/1 gather)

    # ---- conv1 (3x3, stride, pad 1) + fused 1x1 shortcut --------------------------
    acc1 = jnp.zeros((Ho, WoC), jnp.float32)
    sc = None
    for ky in range(3):                                           # unrolled row taps
        rows = row_select(a_bf, Ho, H, stride, ky)                # (Ho, W*Cin) bf16
        acc1 = acc1 + jnp.dot(rows, w1t_ref[ky],
                              preferred_element_type=jnp.float32)
        if ky == 1 and not equal_in_out:
            # 1x1/stride shortcut uses exactly the ky==1 rows (input row = out_row*stride).
            sc = jnp.dot(rows, wsct_ref[...],
                         preferred_element_type=jnp.float32)

    # ---- bn2 + relu2 (VPU, f32) ---------------------------------------------------
    h2 = jnp.maximum(acc1 * s2_ref[...] + b2_ref[...], 0.0)
    # TODO(synk): F.dropout is identity for drop_rate == 0.0; p > 0 not implemented.
    h2_bf = h2.astype(jnp.bfloat16)

    # ---- conv2 (3x3, stride 1, pad 1) ---------------------------------------------
    acc2 = jnp.zeros((Ho, WoC), jnp.float32)
    for ky in range(3):
        rows2 = row_select(h2_bf, Ho, Ho, 1, ky)                  # (Ho, Wo*Cout) bf16
        acc2 = acc2 + jnp.dot(rows2, w2t_ref[ky],
                              preferred_element_type=jnp.float32)

    # ---- residual add (f32) + lane-dense store ------------------------------------
    shortcut = x if equal_in_out else sc                          # f32
    o_ref[0] = (acc2 + shortcut).astype(o_ref.dtype)


# ---------------------------------------------------------------------------
# Plain-JAX glue: parameter folding / Toeplitz weight lowering (weight-only work).
# ---------------------------------------------------------------------------

def fold_bn(gamma, beta, mean, var, eps=1e-5):
    scale = gamma * jax.lax.rsqrt(var + eps)
    bias = beta - mean * scale
    return scale, bias


def toeplitz_conv_weights(w_oihw, w_in, w_out, stride, pad):
    """Lower an OIHW conv weight to per-row-tap matrices for the lane-packed layout.

    Returns (kh, w_in*Cin, w_out*Cout) with
      out[ky, wi*Cin + ci, wo*Cout + co] = w[co, ci, ky, kx]  where kx = wi - (wo*stride - pad)
    and zero where kx is out of range (this encodes column taps, stride and zero padding).
    """
    cout, cin, kh, kw = w_oihw.shape
    w = jnp.transpose(w_oihw, (2, 3, 1, 0))                 # (kh, kw, cin, cout)
    wi = jnp.arange(w_in)[:, None]                          # (w_in, 1)
    wo = jnp.arange(w_out)[None, :]                         # (1, w_out)
    kx = wi - (wo * stride - pad)                           # (w_in, w_out)
    valid = (kx >= 0) & (kx < kw)
    kx_c = jnp.clip(kx, 0, kw - 1)
    blocks = w[:, kx_c]                                     # (kh, w_in, w_out, cin, cout)
    blocks = blocks * valid[None, :, :, None, None].astype(w.dtype)
    blocks = jnp.transpose(blocks, (0, 1, 3, 2, 4))         # (kh, w_in, cin, w_out, cout)
    return blocks.reshape(kh, w_in * cin, w_out * cout)


def basic_block_forward(x_nchw, params, *, stride, equal_in_out):
    N, Cin, H, W = x_nchw.shape
    if equal_in_out:
        # Identity shortcut only makes sense (and only shape-checks in PyTorch) at stride 1.
        assert stride == 1, "equal_in_out BasicBlock requires stride == 1"
    Cout = params["w1"].shape[0]
    Ho = (H + 2 - 3) // stride + 1
    Wo = (W + 2 - 3) // stride + 1

    # Lane-packed NHWC: (N, H, W*Cin); reshape of contiguous NHWC is free.
    x_packed = jnp.transpose(x_nchw, (0, 2, 3, 1)).astype(jnp.float32).reshape(N, H, W * Cin)

    s1, b1 = fold_bn(*params["bn1"])
    s2, b2 = fold_bn(*params["bn2"])
    s1_t = jnp.tile(s1, W).reshape(1, W * Cin)
    b1_t = jnp.tile(b1, W).reshape(1, W * Cin)
    s2_t = jnp.tile(s2, Wo).reshape(1, Wo * Cout)
    b2_t = jnp.tile(b2, Wo).reshape(1, Wo * Cout)

    w1t = toeplitz_conv_weights(params["w1"], W, Wo, stride, pad=1).astype(jnp.bfloat16)
    w2t = toeplitz_conv_weights(params["w2"], Wo, Wo, 1, pad=1).astype(jnp.bfloat16)

    args = [x_packed, s1_t, b1_t, w1t, s2_t, b2_t, w2t]
    in_specs = [
        pl.BlockSpec((1, H, W * Cin), lambda i: (i, 0, 0)),
        pl.BlockSpec((1, W * Cin), lambda i: (0, 0)),
        pl.BlockSpec((1, W * Cin), lambda i: (0, 0)),
        pl.BlockSpec((3, W * Cin, Wo * Cout), lambda i: (0, 0, 0)),
        pl.BlockSpec((1, Wo * Cout), lambda i: (0, 0)),
        pl.BlockSpec((1, Wo * Cout), lambda i: (0, 0)),
        pl.BlockSpec((3, Wo * Cout, Wo * Cout), lambda i: (0, 0, 0)),
    ]
    if not equal_in_out:
        wsct = toeplitz_conv_weights(params["w_sc"], W, Wo, stride, pad=0)[0]
        args.append(wsct.astype(jnp.bfloat16))
        in_specs.append(pl.BlockSpec((W * Cin, Wo * Cout), lambda i: (0, 0)))

    kernel = functools.partial(
        _basic_block_kernel, stride=stride, equal_in_out=equal_in_out,
        H=H, Ho=Ho, Wo=Wo, Cout=Cout)

    out_packed = pl.pallas_call(
        kernel,
        out_shape=jax.ShapeDtypeStruct((N, Ho, Wo * Cout), jnp.float32),
        grid_spec=pltpu.PrefetchScalarGridSpec(
            num_scalar_prefetch=0,
            grid=(N,),
            in_specs=in_specs,
            out_specs=pl.BlockSpec((1, Ho, Wo * Cout), lambda i: (i, 0, 0)),
        ),
        compiler_params=pltpu.CompilerParams(
            dimension_semantics=("parallel",),
            vmem_limit_bytes=32 * 1024 * 1024,
        ),
    )(*args)

    out = out_packed.reshape(N, Ho, Wo, Cout)
    return jnp.transpose(out, (0, 3, 1, 2))                 # back to NCHW


# ---------------------------------------------------------------------------
# Pure-JAX references (mirror the PyTorch forward, eval-mode BN).
# ---------------------------------------------------------------------------

_DN = ("NCHW", "OIHW", "NCHW")


def _bn(y, gamma, beta, mean, var, eps=1e-5):
    s = gamma * jax.lax.rsqrt(var + eps)
    b = beta - mean * s
    return y * s[None, :, None, None] + b[None, :, None, None]


def reference_forward_f32(x, params, *, stride, equal_in_out):
    def conv(inp, w, s, pad):
        return jax.lax.conv_general_dilated(inp, w, (s, s), pad, dimension_numbers=_DN)
    a = jax.nn.relu(_bn(x, *params["bn1"]))
    shortcut = x if equal_in_out else conv(a, params["w_sc"], stride, "VALID")
    h = conv(a, params["w1"], stride, ((1, 1), (1, 1)))
    h2 = jax.nn.relu(_bn(h, *params["bn2"]))
    return conv(h2, params["w2"], 1, ((1, 1), (1, 1))) + shortcut


def reference_forward_bf16(x, params, *, stride, equal_in_out):
    """Same graph, but with the kernel's precision policy (bf16 MXU operands, f32 accum)."""
    def conv(inp, w, s, pad):
        return jax.lax.conv_general_dilated(
            inp.astype(jnp.bfloat16), w.astype(jnp.bfloat16), (s, s), pad,
            dimension_numbers=_DN, preferred_element_type=jnp.float32)
    a = jax.nn.relu(_bn(x, *params["bn1"]))
    shortcut = x if equal_in_out else conv(a, params["w_sc"], stride, "VALID")
    h = conv(a, params["w1"], stride, ((1, 1), (1, 1)))
    h2 = jax.nn.relu(_bn(h, *params["bn2"]))
    return conv(h2, params["w2"], 1, ((1, 1), (1, 1))) + shortcut


# ---------------------------------------------------------------------------
# Main
# ---------------------------------------------------------------------------

def make_params(key, in_planes, out_planes, equal_in_out):
    ks = jax.random.split(key, 12)
    p = {}
    p["bn1"] = (
        0.5 + jax.random.uniform(ks[0], (in_planes,), jnp.float32),      # gamma
        0.1 * jax.random.normal(ks[1], (in_planes,), jnp.float32),       # beta
        0.1 * jax.random.normal(ks[2], (in_planes,), jnp.float32),       # running_mean
        0.5 + jax.random.uniform(ks[3], (in_planes,), jnp.float32),      # running_var
    )
    p["bn2"] = (
        0.5 + jax.random.uniform(ks[4], (out_planes,), jnp.float32),
        0.1 * jax.random.normal(ks[5], (out_planes,), jnp.float32),
        0.1 * jax.random.normal(ks[6], (out_planes,), jnp.float32),
        0.5 + jax.random.uniform(ks[7], (out_planes,), jnp.float32),
    )
    p["w1"] = 0.1 * jax.random.normal(ks[8], (out_planes, in_planes, 3, 3), jnp.float32)
    p["w2"] = 0.1 * jax.random.normal(ks[9], (out_planes, out_planes, 3, 3), jnp.float32)
    if not equal_in_out:
        p["w_sc"] = 0.1 * jax.random.normal(ks[10], (out_planes, in_planes, 1, 1),
                                            jnp.float32)
    return p


if __name__ == "__main__":
    key = jax.random.PRNGKey(0)

    configs = [
        # (in_planes, out_planes, stride, input NCHW shape)
        (4, 8, 2, (2, 4, 16, 16)),   # downsampling block (1x1 conv shortcut, stride 2)
        (8, 8, 1, (2, 8, 16, 16)),   # identity-shortcut block
    ]

    for in_planes, out_planes, stride, shape in configs:
        key, kx, kp = jax.random.split(key, 3)
        equal_in_out = in_planes == out_planes
        x = jax.random.normal(kx, shape, jnp.float32)
        params = make_params(kp, in_planes, out_planes, equal_in_out)

        out = basic_block_forward(x, params, stride=stride, equal_in_out=equal_in_out)
        out = jax.block_until_ready(out)

        ref_bf16 = reference_forward_bf16(x, params, stride=stride,
                                          equal_in_out=equal_in_out)
        ref_f32 = reference_forward_f32(x, params, stride=stride,
                                        equal_in_out=equal_in_out)

        assert out.shape == ref_f32.shape, (out.shape, ref_f32.shape)
        # Strict check vs a reference using the same precision policy (bf16 MXU operands).
        assert bool(jnp.allclose(out, ref_bf16, atol=5e-3, rtol=5e-3)), (
            "mismatch vs bf16-matched reference",
            float(jnp.max(jnp.abs(out - ref_bf16))))
        # Sanity check vs the full-f32 reference (slack covers bf16 operand rounding).
        assert bool(jnp.allclose(out, ref_f32, atol=1e-1, rtol=1e-1)), (
            "mismatch vs f32 reference",
            float(jnp.max(jnp.abs(out - ref_f32))))

    print("KERNEL_OK")
</pallas_src>

<mosaic_0001>
module attributes {stable_mosaic.version = 11 : i64} {
  func.func @_basic_block_kernel(%arg0: i32, %arg1: memref<1x16x64xf32, #tpu.memory_space<vmem>>, %arg2: memref<1x64xf32, #tpu.memory_space<vmem>>, %arg3: memref<1x64xf32, #tpu.memory_space<vmem>>, %arg4: memref<3x64x64xbf16, #tpu.memory_space<vmem>>, %arg5: memref<1x64xf32, #tpu.memory_space<vmem>>, %arg6: memref<1x64xf32, #tpu.memory_space<vmem>>, %arg7: memref<3x64x64xbf16, #tpu.memory_space<vmem>>, %arg8: memref<64x64xbf16, #tpu.memory_space<vmem>>, %arg9: memref<1x8x64xf32, #tpu.memory_space<vmem>>) attributes {dimension_semantics = [#tpu.dimension_semantics<parallel>], iteration_bounds = array<i64: 2>, scalar_prefetch = 0 : i64, scratch_operands = 0 : i64, tpu.core_type = #tpu.core_type<tc>, window_params = [{transform_indices = @transform_0, window_bounds = array<i64: 1, 16, 64>}, {pipeline_mode = #tpu.pipeline_mode<synchronous>, transform_indices = @transform_1, window_bounds = array<i64: 1, 64>}, {pipeline_mode = #tpu.pipeline_mode<synchronous>, transform_indices = @transform_2, window_bounds = array<i64: 1, 64>}, {pipeline_mode = #tpu.pipeline_mode<synchronous>, transform_indices = @transform_3, window_bounds = array<i64: 3, 64, 64>}, {pipeline_mode = #tpu.pipeline_mode<synchronous>, transform_indices = @transform_4, window_bounds = array<i64: 1, 64>}, {pipeline_mode = #tpu.pipeline_mode<synchronous>, transform_indices = @transform_5, window_bounds = array<i64: 1, 64>}, {pipeline_mode = #tpu.pipeline_mode<synchronous>, transform_indices = @transform_6, window_bounds = array<i64: 3, 64, 64>}, {pipeline_mode = #tpu.pipeline_mode<synchronous>, transform_indices = @transform_7, window_bounds = array<i64: 64, 64>}, {transform_indices = @transform_8, window_bounds = array<i64: 1, 8, 64>}]} {
    %c0 = arith.constant 0 : index
    %c0_0 = arith.constant 0 : index
    %c0_1 = arith.constant 0 : index
    %0 = vector.load %arg1[%c0, %c0_0, %c0_1] : memref<1x16x64xf32, #tpu.memory_space<vmem>>, vector<1x16x64xf32>
    %1 = vector.shape_cast %0 : vector<1x16x64xf32> to vector<16x64xf32>
    %c0_2 = arith.constant 0 : index
    %c0_3 = arith.constant 0 : index
    %2 = vector.load %arg2[%c0_2, %c0_3] : memref<1x64xf32, #tpu.memory_space<vmem>>, vector<1x64xf32>
    %3 = vector.broadcast %2 : vector<1x64xf32> to vector<16x64xf32>
    %4 = arith.mulf %1, %3 : vector<16x64xf32>
    %c0_4 = arith.constant 0 : index
    %c0_5 = arith.constant 0 : index
    %5 = vector.load %arg3[%c0_4, %c0_5] : memref<1x64xf32, #tpu.memory_space<vmem>>, vector<1x64xf32>
    %6 = vector.broadcast %5 : vector<1x64xf32> to vector<16x64xf32>
    %7 = arith.addf %4, %6 : vector<16x64xf32>
    %cst = arith.constant 0.000000e+00 : f32
    %8 = vector.broadcast %cst : f32 to vector<16x64xf32>
    %9 = arith.maximumf %7, %8 : vector<16x64xf32>
    %10 = arith.truncf %9 : vector<16x64xf32> to vector<16x64xbf16>
    %cst_6 = arith.constant 0.000000e+00 : f32
    %11 = vector.broadcast %cst_6 : f32 to vector<8x64xf32>
    %12 = tpu.iota {dimensions = array<i32: 0>} : vector<8x16xi32>
    %13 = tpu.iota {dimensions = array<i32: 1>} : vector<8x16xi32>
    %c2_i32 = arith.constant 2 : i32
    %14 = vector.broadcast %c2_i32 : i32 to vector<8x16xi32>
    %15 = arith.muli %12, %14 : vector<8x16xi32>
    %c-1_i32 = arith.constant -1 : i32
    %16 = vector.broadcast %c-1_i32 : i32 to vector<8x16xi32>
    %17 = arith.addi %15, %16 : vector<8x16xi32>
    %18 = arith.cmpi eq, %13, %17 : vector<8x16xi32>
    %cst_7 = arith.constant 1.000000e+00 : f32
    %cst_8 = arith.constant 0.000000e+00 : f32
    %19 = vector.broadcast %cst_7 : f32 to vector<8x16xf32>
    %20 = vector.broadcast %cst_8 : f32 to vector<8x16xf32>
    %21 = arith.select %18, %19, %20 : vector<8x16xi1>, vector<8x16xf32>
    %22 = arith.truncf %21 : vector<8x16xf32> to vector<8x16xbf16>
    %cst_9 = arith.constant dense<0.000000e+00> : vector<8x64xf32>
    %23 = tpu.matmul %22, %10, %cst_9 {dimension_numbers = #tpu.dot_dimension_numbers<[1], [0], [0], [1], [0, 0, 1, 1], [], []>} : vector<8x16xbf16>, vector<16x64xbf16>, vector<8x64xf32> -> vector<8x64xf32>
    %24 = arith.truncf %23 : vector<8x64xf32> to vector<8x64xbf16>
    %c0_10 = arith.constant 0 : index
    %c0_11 = arith.constant 0 : index
    %c0_12 = arith.constant 0 : index
    %25 = vector.load %arg4[%c0_10, %c0_11, %c0_12] : memref<3x64x64xbf16, #tpu.memory_space<vmem>>, vector<1x64x64xbf16>
    %26 = vector.shape_cast %25 : vector<1x64x64xbf16> to vector<64x64xbf16>
    %cst_13 = arith.constant dense<0.000000e+00> : vector<8x64xf32>
    %27 = tpu.matmul %24, %26, %cst_13 {dimension_numbers = #tpu.dot_dimension_numbers<[1], [0], [0], [1], [0, 0, 1, 1], [], []>} : vector<8x64xbf16>, vector<64x64xbf16>, vector<8x64xf32> -> vector<8x64xf32>
    %28 = arith.addf %11, %27 : vector<8x64xf32>
    %29 = tpu.iota {dimensions = array<i32: 0>} : vector<8x16xi32>
    %30 = tpu.iota {dimensions = array<i32: 1>} : vector<8x16xi32>
    %c2_i32_14 = arith.constant 2 : i32
    %31 = vector.broadcast %c2_i32_14 : i32 to vector<8x16xi32>
    %32 = arith.muli %29, %31 : vector<8x16xi32>
    %c0_i32 = arith.constant 0 : i32
    %33 = vector.broadcast %c0_i32 : i32 to vector<8x16xi32>
    %34 = arith.addi %32, %33 : vector<8x16xi32>
    %35 = arith.cmpi eq, %30, %34 : vector<8x16xi32>
    %cst_15 = arith.constant 1.000000e+00 : f32
    %cst_16 = arith.constant 0.000000e+00 : f32
    %36 = vector.broadcast %cst_15 : f32 to vector<8x16xf32>
    %37 = vector.broadcast %cst_16 : f32 to vector<8x16xf32>
    %38 = arith.select %35, %36, %37 : vector<8x16xi1>, vector<8x16xf32>
    %39 = arith.truncf %38 : vector<8x16xf32> to vector<8x16xbf16>
    %cst_17 = arith.constant dense<0.000000e+00> : vector<8x64xf32>
    %40 = tpu.matmul %39, %10, %cst_17 {dimension_numbers = #tpu.dot_dimension_numbers<[1], [0], [0], [1], [0, 0, 1, 1], [], []>} : vector<8x16xbf16>, vector<16x64xbf16>, vector<8x64xf32> -> vector<8x64xf32>
    %41 = arith.truncf %40 : vector<8x64xf32> to vector<8x64xbf16>
    %c1 = arith.constant 1 : index
    %c0_18 = arith.constant 0 : index
    %c0_19 = arith.constant 0 : index
    %42 = vector.load %arg4[%c1, %c0_18, %c0_19] : memref<3x64x64xbf16, #tpu.memory_space<vmem>>, vector<1x64x64xbf16>
    %43 = vector.shape_cast %42 : vector<1x64x64xbf16> to vector<64x64xbf16>
    %cst_20 = arith.constant dense<0.000000e+00> : vector<8x64xf32>
    %44 = tpu.matmul %41, %43, %cst_20 {dimension_numbers = #tpu.dot_dimension_numbers<[1], [0], [0], [1], [0, 0, 1, 1], [], []>} : vector<8x64xbf16>, vector<64x64xbf16>, vector<8x64xf32> -> vector<8x64xf32>
    %45 = arith.addf %28, %44 : vector<8x64xf32>
    %c0_21 = arith.constant 0 : index
    %c0_22 = arith.constant 0 : index
    %46 = vector.load %arg8[%c0_21, %c0_22] : memref<64x64xbf16, #tpu.memory_space<vmem>>, vector<64x64xbf16>
    %cst_23 = arith.constant dense<0.000000e+00> : vector<8x64xf32>
    %47 = tpu.matmul %41, %46, %cst_23 {dimension_numbers = #tpu.dot_dimension_numbers<[1], [0], [0], [1], [0, 0, 1, 1], [], []>} : vector<8x64xbf16>, vector<64x64xbf16>, vector<8x64xf32> -> vector<8x64xf32>
    %48 = tpu.iota {dimensions = array<i32: 0>} : vector<8x16xi32>
    %49 = tpu.iota {dimensions = array<i32: 1>} : vector<8x16xi32>
    %c2_i32_24 = arith.constant 2 : i32
    %50 = vector.broadcast %c2_i32_24 : i32 to vector<8x16xi32>
    %51 = arith.muli %48, %50 : vector<8x16xi32>
    %c1_i32 = arith.constant 1 : i32
    %52 = vector.broadcast %c1_i32 : i32 to vector<8x16xi32>
    %53 = arith.addi %51, %52 : vector<8x16xi32>
    %54 = arith.cmpi eq, %49, %53 : vector<8x16xi32>
    %cst_25 = arith.constant 1.000000e+00 : f32
    %cst_26 = arith.constant 0.000000e+00 : f32
    %55 = vector.broadcast %cst_25 : f32 to vector<8x16xf32>
    %56 = vector.broadcast %cst_26 : f32 to vector<8x16xf32>
    %57 = arith.select %54, %55, %56 : vector<8x16xi1>, vector<8x16xf32>
    %58 = arith.truncf %57 : vector<8x16xf32> to vector<8x16xbf16>
    %cst_27 = arith.constant dense<0.000000e+00> : vector<8x64xf32>
    %59 = tpu.matmul %58, %10, %cst_27 {dimension_numbers = #tpu.dot_dimension_numbers<[1], [0], [0], [1], [0, 0, 1, 1], [], []>} : vector<8x16xbf16>, vector<16x64xbf16>, vector<8x64xf32> -> vector<8x64xf32>
    %60 = arith.truncf %59 : vector<8x64xf32> to vector<8x64xbf16>
    %c2 = arith.constant 2 : index
    %c0_28 = arith.constant 0 : index
    %c0_29 = arith.constant 0 : index
    %61 = vector.load %arg4[%c2, %c0_28, %c0_29] : memref<3x64x64xbf16, #tpu.memory_space<vmem>>, vector<1x64x64xbf16>
    %62 = vector.shape_cast %61 : vector<1x64x64xbf16> to vector<64x64xbf16>
    %cst_30 = arith.constant dense<0.000000e+00> : vector<8x64xf32>
    %63 = tpu.matmul %60, %62, %cst_30 {dimension_numbers = #tpu.dot_dimension_numbers<[1], [0], [0], [1], [0, 0, 1, 1], [], []>} : vector<8x64xbf16>, vector<64x64xbf16>, vector<8x64xf32> -> vector<8x64xf32>
    %64 = arith.addf %45, %63 : vector<8x64xf32>
    %c0_31 = arith.constant 0 : index
    %c0_32 = arith.constant 0 : index
    %65 = vector.load %arg5[%c0_31, %c0_32] : memref<1x64xf32, #tpu.memory_space<vmem>>, vector<1x64xf32>
    %66 = vector.broadcast %65 : vector<1x64xf32> to vector<8x64xf32>
    %67 = arith.mulf %64, %66 : vector<8x64xf32>
    %c0_33 = arith.constant 0 : index
    %c0_34 = arith.constant 0 : index
    %68 = vector.load %arg6[%c0_33, %c0_34] : memref<1x64xf32, #tpu.memory_space<vmem>>, vector<1x64xf32>
    %69 = vector.broadcast %68 : vector<1x64xf32> to vector<8x64xf32>
    %70 = arith.addf %67, %69 : vector<8x64xf32>
    %cst_35 = arith.constant 0.000000e+00 : f32
    %71 = vector.broadcast %cst_35 : f32 to vector<8x64xf32>
    %72 = arith.maximumf %70, %71 : vector<8x64xf32>
    %73 = arith.truncf %72 : vector<8x64xf32> to vector<8x64xbf16>
    %cst_36 = arith.constant 0.000000e+00 : f32
    %74 = vector.broadcast %cst_36 : f32 to vector<8x64xf32>
    %75 = tpu.iota {dimensions = array<i32: 0>} : vector<8x8xi32>
    %76 = tpu.iota {dimensions = array<i32: 1>} : vector<8x8xi32>
    %c1_i32_37 = arith.constant 1 : i32
    %77 = vector.broadcast %c1_i32_37 : i32 to vector<8x8xi32>
    %78 = arith.muli %75, %77 : vector<8x8xi32>
    %c-1_i32_38 = arith.constant -1 : i32
    %79 = vector.broadcast %c-1_i32_38 : i32 to vector<8x8xi32>
    %80 = arith.addi %78, %79 : vector<8x8xi32>
    %81 = arith.cmpi eq, %76, %80 : vector<8x8xi32>
    %cst_39 = arith.constant 1.000000e+00 : f32
    %cst_40 = arith.constant 0.000000e+00 : f32
    %82 = vector.broadcast %cst_39 : f32 to vector<8x8xf32>
    %83 = vector.broadcast %cst_40 : f32 to vector<8x8xf32>
    %84 = arith.select %81, %82, %83 : vector<8x8xi1>, vector<8x8xf32>
    %85 = arith.truncf %84 : vector<8x8xf32> to vector<8x8xbf16>
    %cst_41 = arith.constant dense<0.000000e+00> : vector<8x64xf32>
    %86 = tpu.matmul %85, %73, %cst_41 {dimension_numbers = #tpu.dot_dimension_numbers<[1], [0], [0], [1], [0, 0, 1, 1], [], []>} : vector<8x8xbf16>, vector<8x64xbf16>, vector<8x64xf32> -> vector<8x64xf32>
    %87 = arith.truncf %86 : vector<8x64xf32> to vector<8x64xbf16>
    %c0_42 = arith.constant 0 : index
    %c0_43 = arith.constant 0 : index
    %c0_44 = arith.constant 0 : index
    %88 = vector.load %arg7[%c0_42, %c0_43, %c0_44] : memref<3x64x64xbf16, #tpu.memory_space<vmem>>, vector<1x64x64xbf16>
    %89 = vector.shape_cast %88 : vector<1x64x64xbf16> to vector<64x64xbf16>
    %cst_45 = arith.constant dense<0.000000e+00> : vector<8x64xf32>
    %90 = tpu.matmul %87, %89, %cst_45 {dimension_numbers = #tpu.dot_dimension_numbers<[1], [0], [0], [1], [0, 0, 1, 1], [], []>} : vector<8x64xbf16>, vector<64x64xbf16>, vector<8x64xf32> -> vector<8x64xf32>
    %91 = arith.addf %74, %90 : vector<8x64xf32>
    %92 = tpu.iota {dimensions = array<i32: 0>} : vector<8x8xi32>
    %93 = tpu.iota {dimensions = array<i32: 1>} : vector<8x8xi32>
    %c1_i32_46 = arith.constant 1 : i32
    %94 = vector.broadcast %c1_i32_46 : i32 to vector<8x8xi32>
    %95 = arith.muli %92, %94 : vector<8x8xi32>
    %c0_i32_47 = arith.constant 0 : i32
    %96 = vector.broadcast %c0_i32_47 : i32 to vector<8x8xi32>
    %97 = arith.addi %95, %96 : vector<8x8xi32>
    %98 = arith.cmpi eq, %93, %97 : vector<8x8xi32>
    %cst_48 = arith.constant 1.000000e+00 : f32
    %cst_49 = arith.constant 0.000000e+00 : f32
    %99 = vector.broadcast %cst_48 : f32 to vector<8x8xf32>
    %100 = vector.broadcast %cst_49 : f32 to vector<8x8xf32>
    %101 = arith.select %98, %99, %100 : vector<8x8xi1>, vector<8x8xf32>
    %102 = arith.truncf %101 : vector<8x8xf32> to vector<8x8xbf16>
    %cst_50 = arith.constant dense<0.000000e+00> : vector<8x64xf32>
    %103 = tpu.matmul %102, %73, %cst_50 {dimension_numbers = #tpu.dot_dimension_numbers<[1], [0], [0], [1], [0, 0, 1, 1], [], []>} : vector<8x8xbf16>, vector<8x64xbf16>, vector<8x64xf32> -> vector<8x64xf32>
    %104 = arith.truncf %103 : vector<8x64xf32> to vector<8x64xbf16>
    %c1_51 = arith.constant 1 : index
    %c0_52 = arith.constant 0 : index
    %c0_53 = arith.constant 0 : index
    %105 = vector.load %arg7[%c1_51, %c0_52, %c0_53] : memref<3x64x64xbf16, #tpu.memory_space<vmem>>, vector<1x64x64xbf16>
    %106 = vector.shape_cast %105 : vector<1x64x64xbf16> to vector<64x64xbf16>
    %cst_54 = arith.constant dense<0.000000e+00> : vector<8x64xf32>
    %107 = tpu.matmul %104, %106, %cst_54 {dimension_numbers = #tpu.dot_dimension_numbers<[1], [0], [0], [1], [0, 0, 1, 1], [], []>} : vector<8x64xbf16>, vector<64x64xbf16>, vector<8x64xf32> -> vector<8x64xf32>
    %108 = arith.addf %91, %107 : vector<8x64xf32>
    %109 = tpu.iota {dimensions = array<i32: 0>} : vector<8x8xi32>
    %110 = tpu.iota {dimensions = array<i32: 1>} : vector<8x8xi32>
    %c1_i32_55 = arith.constant 1 : i32
    %111 = vector.broadcast %c1_i32_55 : i32 to vector<8x8xi32>
    %112 = arith.muli %109, %111 : vector<8x8xi32>
    %c1_i32_56 = arith.constant 1 : i32
    %113 = vector.broadcast %c1_i32_56 : i32 to vector<8x8xi32>
    %114 = arith.addi %112, %113 : vector<8x8xi32>
    %115 = arith.cmpi eq, %110, %114 : vector<8x8xi32>
    %cst_57 = arith.constant 1.000000e+00 : f32
    %cst_58 = arith.constant 0.000000e+00 : f32
    %116 = vector.broadcast %cst_57 : f32 to vector<8x8xf32>
    %117 = vector.broadcast %cst_58 : f32 to vector<8x8xf32>
    %118 = arith.select %115, %116, %117 : vector<8x8xi1>, vector<8x8xf32>
    %119 = arith.truncf %118 : vector<8x8xf32> to vector<8x8xbf16>
    %cst_59 = arith.constant dense<0.000000e+00> : vector<8x64xf32>
    %120 = tpu.matmul %119, %73, %cst_59 {dimension_numbers = #tpu.dot_dimension_numbers<[1], [0], [0], [1], [0, 0, 1, 1], [], []>} : vector<8x8xbf16>, vector<8x64xbf16>, vector<8x64xf32> -> vector<8x64xf32>
    %121 = arith.truncf %120 : vector<8x64xf32> to vector<8x64xbf16>
    %c2_60 = arith.constant 2 : index
    %c0_61 = arith.constant 0 : index
    %c0_62 = arith.constant 0 : index
    %122 = vector.load %arg7[%c2_60, %c0_61, %c0_62] : memref<3x64x64xbf16, #tpu.memory_space<vmem>>, vector<1x64x64xbf16>
    %123 = vector.shape_cast %122 : vector<1x64x64xbf16> to vector<64x64xbf16>
    %cst_63 = arith.constant dense<0.000000e+00> : vector<8x64xf32>
    %124 = tpu.matmul %121, %123, %cst_63 {dimension_numbers = #tpu.dot_dimension_numbers<[1], [0], [0], [1], [0, 0, 1, 1], [], []>} : vector<8x64xbf16>, vector<64x64xbf16>, vector<8x64xf32> -> vector<8x64xf32>
    %125 = arith.addf %108, %124 : vector<8x64xf32>
    %126 = arith.addf %125, %47 : vector<8x64xf32>
    %c0_64 = arith.constant 0 : index
    %c0_65 = arith.constant 0 : index
    %c0_66 = arith.constant 0 : index
    %127 = vector.load %arg9[%c0_64, %c0_65, %c0_66] : memref<1x8x64xf32, #tpu.memory_space<vmem>>, vector<1x8x64xf32>
    %128 = vector.shape_cast %127 : vector<1x8x64xf32> to vector<8x64xf32>
    %129 = vector.shape_cast %126 : vector<8x64xf32> to vector<1x8x64xf32>
    tpu.vector_store %arg9[%c0_64, %c0_65, %c0_66], %129 {strides = array<i32>} : memref<1x8x64xf32, #tpu.memory_space<vmem>>, vector<1x8x64xf32>,
    return
  }
  func.func @transform_0(%arg0: i32) -> (i32, i32, i32) {
    %c0_i32 = arith.constant 0 : i32
    %c0_i32_0 = arith.constant 0 : i32
    %c0_i32_1 = arith.constant 0 : i32
    return %arg0, %c0_i32, %c0_i32_0 : i32, i32, i32
  }
  func.func @transform_1(%arg0: i32) -> (i32, i32) {
    %c0_i32 = arith.constant 0 : i32
    %c0_i32_0 = arith.constant 0 : i32
    %c0_i32_1 = arith.constant 0 : i32
    return %c0_i32, %c0_i32_0 : i32, i32
  }
  func.func @transform_2(%arg0: i32) -> (i32, i32) {
    %c0_i32 = arith.constant 0 : i32
    %c0_i32_0 = arith.constant 0 : i32
    %c0_i32_1 = arith.constant 0 : i32
    return %c0_i32, %c0_i32_0 : i32, i32
  }
  func.func @transform_3(%arg0: i32) -> (i32, i32, i32) {
    %c0_i32 = arith.constant 0 : i32
    %c0_i32_0 = arith.constant 0 : i32
    %c0_i32_1 = arith.constant 0 : i32
    %c0_i32_2 = arith.constant 0 : i32
    return %c0_i32, %c0_i32_0, %c0_i32_1 : i32, i32, i32
  }
  func.func @transform_4(%arg0: i32) -> (i32, i32) {
    %c0_i32 = arith.constant 0 : i32
    %c0_i32_0 = arith.constant 0 : i32
    %c0_i32_1 = arith.constant 0 : i32
    return %c0_i32, %c0_i32_0 : i32, i32
  }
  func.func @transform_5(%arg0: i32) -> (i32, i32) {
    %c0_i32 = arith.constant 0 : i32
    %c0_i32_0 = arith.constant 0 : i32
    %c0_i32_1 = arith.constant 0 : i32
    return %c0_i32, %c0_i32_0 : i32, i32
  }
  func.func @transform_6(%arg0: i32) -> (i32, i32, i32) {
    %c0_i32 = arith.constant 0 : i32
    %c0_i32_0 = arith.constant 0 : i32
    %c0_i32_1 = arith.constant 0 : i32
    %c0_i32_2 = arith.constant 0 : i32
    return %c0_i32, %c0_i32_0, %c0_i32_1 : i32, i32, i32
  }
  func.func @transform_7(%arg0: i32) -> (i32, i32) {
    %c0_i32 = arith.constant 0 : i32
    %c0_i32_0 = arith.constant 0 : i32
    %c0_i32_1 = arith.constant 0 : i32
    return %c0_i32, %c0_i32_0 : i32, i32
  }
  func.func @transform_8(%arg0: i32) -> (i32, i32, i32) {
    %c0_i32 = arith.constant 0 : i32
    %c0_i32_0 = arith.constant 0 : i32
    %c0_i32_1 = arith.constant 0 : i32
    return %arg0, %c0_i32, %c0_i32_0 : i32, i32, i32
  }
}

</mosaic_0001>

<llo_original>
// kernel: tpu_custom_call.1
$region0: #{tpu_custom_call.1}
  #allocation0 [shape = 'u32[]', space=smem, size = 0x4, offset = 0x4, fixed_abs, tag = 'smem constant byte address 0x4 - core index']
  #allocation1 [shape = 'u32[144,128]{1,0:T(1,128)}', space=vmem, size = 0x12000, scoped, tag = 'internal scratch']
  %s0 = inlined_call_operand.hbm [shape: f32[2,16,64], index: 0, kind: input, shape index: {}]
  %s1 = inlined_call_operand.vmem [shape: f32[1,64], index: 1, kind: input, shape index: {}]
  %s2 = inlined_call_operand.vmem [shape: f32[1,64], index: 2, kind: input, shape index: {}]
  %s3 = inlined_call_operand.hbm [shape: bf16[3,64,64], index: 3, kind: input, shape index: {}]
  %s4 = inlined_call_operand.vmem [shape: f32[1,64], index: 4, kind: input, shape index: {}]
  %s5 = inlined_call_operand.vmem [shape: f32[1,64], index: 5, kind: input, shape index: {}]
  %s6 = inlined_call_operand.hbm [shape: bf16[3,64,64], index: 6, kind: input, shape index: {}]
  %s7 = inlined_call_operand.hbm [shape: bf16[64,64], index: 7, kind: input, shape index: {}]
  %s8 = inlined_call_operand.hbm [shape: f32[2,8,64], index: 8, kind: output, shape index: {}]
  %s9 = sld [smem:[#allocation0]]
  $region81: #{tpu_custom_call.1} parent=0
    _
  %s11 = ssub.s32 1, %s9
  %s12 = scalar_select 0, %s11, %s9
  $region1: #{tpu_custom_call.1} parent=0
    #allocation2 [shape = 'u8[16384]{0}', space=vmem, size = 0x4000, scoped, tag = 'input window, operand 0']
    #allocation3 [shape = 's32[2]{0}', space=sflag, size = 0x8, scoped, tag = 'scoped memory for tpu_custom_call.1']
    #allocation4 [shape = 's32[2]{0}', space=sflag, size = 0x8, scoped, tag = 'scoped memory for tpu_custom_call.1']
    #allocation5 [shape = 'u8[49152]{0}', space=vmem, size = 0xc000, scoped, tag = 'input window, operand 3, single buffered']
    #allocation6 [shape = 's32[1]{0}', space=sflag, size = 0x4, scoped, tag = 'scoped memory for tpu_custom_call.1']
    #allocation7 [shape = 'u8[49152]{0}', space=vmem, size = 0xc000, scoped, tag = 'input window, operand 6, single buffered']
    #allocation8 [shape = 'u8[16384]{0}', space=vmem, size = 0x4000, scoped, tag = 'input window, operand 7, single buffered']
    #allocation9 [shape = 's32[1]{0}', space=sflag, size = 0x4, scoped, tag = 'scoped memory for tpu_custom_call.1']
    #allocation10 [shape = 'u8[8192]{0}', space=vmem, size = 0x2000, scoped, tag = 'output window, operand 0']
    %13 = vsyncpa [#allocation3], 0
    %s14 = scalar_lea.sflag [#allocation3], 1
    %15 = vsyncpa %s14, 0
    %16 = vsyncpa [#allocation6], 0
    %17 = vsyncpa [#allocation9], 0
    %18 = vsyncpa [#allocation4], 0
    %s19 = scalar_lea.sflag [#allocation4], 1
    %20 = vsyncpa %s19, 0
    loop: start=0, step=1, limit=4
    $region2: #{tpu_custom_call.1} parent=1 // loop_pre_header
      _
    $region3: #{tpu_custom_call.1} parent=1 // loop_header
      %s22 = sphi 0, %s26
      %p23 = scmp.ge.s32.totalorder %s22, 4
      %s32 = sphi 0, %s34
      %s35 = sphi 0, %s32
      %s36 = sphi 0, %s35
      %s52 = sphi 0, %s36
      %s56 = sphi 0, %s56
      %s58 = sphi 0, %s56
      %s59 = sphi 0, %s58
      %s73 = sphi 0, %s59
      %s77 = sphi 0, %s77
      %s79 = sphi 0, %s77
      %s80 = sphi 0, %s79
      %s94 = sphi 0, %s80
      %s98 = sphi 0, %s98
      %s100 = sphi 0, %s98
      %s101 = sphi 0, %s100
      %s115 = sphi 0, %s101
      %s119 = sphi 0, %s119
      %s121 = sphi 0, %s119
      %s122 = sphi 0, %s121
      %s136 = sphi 0, %s122
      %s140 = sphi 0, %s140
      %s142 = sphi 0, %s140
      %s143 = sphi 0, %s142
      %s157 = sphi 0, %s143
      %s161 = sphi 0, %s161
      %s163 = sphi 0, %s161
      %s164 = sphi 0, %s163
      %s178 = sphi 0, %s164
      %s182 = sphi 0, %s182
      %s184 = sphi 0, %s182
      %s185 = sphi 0, %s184
      %s199 = sphi 0, %s185
      %s205 = sphi 0, %s207
      %s208 = sphi 0, %s205
      %s209 = sphi 0, %s208
      %s225 = sphi 0, %s209
    $region4: #{tpu_custom_call.1} parent=1 // loop_header_branch
      %25 = sbr.rel (%p23) target = $region8
    $region5: #{tpu_custom_call.1} parent=1 // loop_body
      %s27 = ssub.s32 %s22, 1
      %s28 = ssub.s32 %s22, 2
      %s29 = sadd.s32 %s22, 1
      %s30 = ssub.s32 %s22, %s29
      %p31 = scmp.eq.s32.totalorder %s30, 0
      %s33 = sadd.s32 %s32, 1
      %s34 = scalar_select %p31, %s32, %s33
      %p37 = pneg %p31
      %p38 = scmp.eq.s32.totalorder %s22, 1
      %p39 = por %p37, %p38
      %p40 = scmp.ne.s32.totalorder %s32, %s35
      %p41 = scmp.eq.s32.totalorder %s22, 0
      %p42 = por %p40, %p41
      %p43 = scmp.ne.s32.totalorder %s32, %s35
      %p44 = scmp.eq.s32.totalorder %s27, 1
      %p45 = por %p43, %p44
      %p46 = scmp.ne.s32.totalorder %s35, %s36
      %p47 = scmp.eq.s32.totalorder %s27, 0
      %p48 = por %p46, %p47
      %p49 = scmp.ne.s32.totalorder %s35, %s36
      %p50 = scmp.eq.s32.totalorder %s28, 1
      %p51 = por %p49, %p50
      %p53 = scmp.ne.s32.totalorder %s36, %s52
      %p54 = scmp.eq.s32.totalorder %s28, 0
      %p55 = por %p53, %p54
      %s57 = sadd.s32 %s56, 1
      %p60 = scmp.eq.s32.totalorder %s22, 1
      %p61 = scmp.ne.s32.totalorder %s56, %s58
      %p62 = scmp.eq.s32.totalorder %s22, 0
      %p63 = por %p61, %p62
      %p64 = scmp.ne.s32.totalorder %s56, %s58
      %p65 = scmp.eq.s32.totalorder %s27, 1
      %p66 = por %p64, %p65
      %p67 = scmp.ne.s32.totalorder %s58, %s59
      %p68 = scmp.eq.s32.totalorder %s27, 0
      %p69 = por %p67, %p68
      %p70 = scmp.ne.s32.totalorder %s58, %s59
      %p71 = scmp.eq.s32.totalorder %s28, 1
      %p72 = por %p70, %p71
      %p74 = scmp.ne.s32.totalorder %s59, %s73
      %p75 = scmp.eq.s32.totalorder %s28, 0
      %p76 = por %p74, %p75
      %s78 = sadd.s32 %s77, 1
      %p81 = scmp.eq.s32.totalorder %s22, 1
      %p82 = scmp.ne.s32.totalorder %s77, %s79
      %p83 = scmp.eq.s32.totalorder %s22, 0
      %p84 = por %p82, %p83
      %p85 = scmp.ne.s32.totalorder %s77, %s79
      %p86 = scmp.eq.s32.totalorder %s27, 1
      %p87 = por %p85, %p86
      %p88 = scmp.ne.s32.totalorder %s79, %s80
      %p89 = scmp.eq.s32.totalorder %s27, 0
      %p90 = por %p88, %p89
      %p91 = scmp.ne.s32.totalorder %s79, %s80
      %p92 = scmp.eq.s32.totalorder %s28, 1
      %p93 = por %p91, %p92
      %p95 = scmp.ne.s32.totalorder %s80, %s94
      %p96 = scmp.eq.s32.totalorder %s28, 0
      %p97 = por %p95, %p96
      %s99 = sadd.s32 %s98, 1
      %p102 = scmp.eq.s32.totalorder %s22, 1
      %p103 = scmp.ne.s32.totalorder %s98, %s100
      %p104 = scmp.eq.s32.totalorder %s22, 0
      %p105 = por %p103, %p104
      %p106 = scmp.ne.s32.totalorder %s98, %s100
      %p107 = scmp.eq.s32.totalorder %s27, 1
      %p108 = por %p106, %p107
      %p109 = scmp.ne.s32.totalorder %s100, %s101
      %p110 = scmp.eq.s32.totalorder %s27, 0
      %p111 = por %p109, %p110
      %p112 = scmp.ne.s32.totalorder %s100, %s101
      %p113 = scmp.eq.s32.totalorder %s28, 1
      %p114 = por %p112, %p113
      %p116 = scmp.ne.s32.totalorder %s101, %s115
      %p117 = scmp.eq.s32.totalorder %s28, 0
      %p118 = por %p116, %p117
      %s120 = sadd.s32 %s119, 1
      %p123 = scmp.eq.s32.totalorder %s22, 1
      %p124 = scmp.ne.s32.totalorder %s119, %s121
      %p125 = scmp.eq.s32.totalorder %s22, 0
      %p126 = por %p124, %p125
      %p127 = scmp.ne.s32.totalorder %s119, %s121
      %p128 = scmp.eq.s32.totalorder %s27, 1
      %p129 = por %p127, %p128
      %p130 = scmp.ne.s32.totalorder %s121, %s122
      %p131 = scmp.eq.s32.totalorder %s27, 0
      %p132 = por %p130, %p131
      %p133 = scmp.ne.s32.totalorder %s121, %s122
      %p134 = scmp.eq.s32.totalorder %s28, 1
      %p135 = por %p133, %p134
      %p137 = scmp.ne.s32.totalorder %s122, %s136
      %p138 = scmp.eq.s32.totalorder %s28, 0
      %p139 = por %p137, %p138
      %s141 = sadd.s32 %s140, 1
      %p144 = scmp.eq.s32.totalorder %s22, 1
      %p145 = scmp.ne.s32.totalorder %s140, %s142
      %p146 = scmp.eq.s32.totalorder %s22, 0
      %p147 = por %p145, %p146
      %p148 = scmp.ne.s32.totalorder %s140, %s142
      %p149 = scmp.eq.s32.totalorder %s27, 1
      %p150 = por %p148, %p149
      %p151 = scmp.ne.s32.totalorder %s142, %s143
      %p152 = scmp.eq.s32.totalorder %s27, 0
      %p153 = por %p151, %p152
      %p154 = scmp.ne.s32.totalorder %s142, %s143
      %p155 = scmp.eq.s32.totalorder %s28, 1
      %p156 = por %p154, %p155
      %p158 = scmp.ne.s32.totalorder %s143, %s157
      %p159 = scmp.eq.s32.totalorder %s28, 0
      %p160 = por %p158, %p159
      %s162 = sadd.s32 %s161, 1
      %p165 = scmp.eq.s32.totalorder %s22, 1
      %p166 = scmp.ne.s32.totalorder %s161, %s163
      %p167 = scmp.eq.s32.totalorder %s22, 0
      %p168 = por %p166, %p167
      %p169 = scmp.ne.s32.totalorder %s161, %s163
      %p170 = scmp.eq.s32.totalorder %s27, 1
      %p171 = por %p169, %p170
      %p172 = scmp.ne.s32.totalorder %s163, %s164
      %p173 = scmp.eq.s32.totalorder %s27, 0
      %p174 = por %p172, %p173
      %p175 = scmp.ne.s32.totalorder %s163, %s164
      %p176 = scmp.eq.s32.totalorder %s28, 1
      %p177 = por %p175, %p176
      %p179 = scmp.ne.s32.totalorder %s164, %s178
      %p180 = scmp.eq.s32.totalorder %s28, 0
      %p181 = por %p179, %p180
      %s183 = sadd.s32 %s182, 1
      %p186 = scmp.eq.s32.totalorder %s22, 1
      %p187 = scmp.ne.s32.totalorder %s182, %s184
      %p188 = scmp.eq.s32.totalorder %s22, 0
      %p189 = por %p187, %p188
      %p190 = scmp.ne.s32.totalorder %s182, %s184
      %p191 = scmp.eq.s32.totalorder %s27, 1
      %p192 = por %p190, %p191
      %p193 = scmp.ne.s32.totalorder %s184, %s185
      %p194 = scmp.eq.s32.totalorder %s27, 0
      %p195 = por %p193, %p194
      %p196 = scmp.ne.s32.totalorder %s184, %s185
      %p197 = scmp.eq.s32.totalorder %s28, 1
      %p198 = por %p196, %p197
      %p200 = scmp.ne.s32.totalorder %s185, %s199
      %p201 = scmp.eq.s32.totalorder %s28, 0
      %p202 = por %p200, %p201
      %s203 = ssub.s32 %s22, %s29
      %p204 = scmp.eq.s32.totalorder %s203, 0
      %s206 = sadd.s32 %s205, 1
      %s207 = scalar_select %p204, %s205, %s206
      %p210 = pneg %p204
      %p211 = scmp.eq.s32.totalorder %s22, 1
      %p212 = por %p210, %p211
      %p213 = scmp.ne.s32.totalorder %s205, %s208
      %p214 = scmp.eq.s32.totalorder %s22, 0
      %p215 = por %p213, %p214
      %p216 = scmp.ne.s32.totalorder %s205, %s208
      %p217 = scmp.eq.s32.totalorder %s27, 1
      %p218 = por %p216, %p217
      %p219 = scmp.ne.s32.totalorder %s208, %s209
      %p220 = scmp.eq.s32.totalorder %s27, 0
      %p221 = por %p219, %p220
      %p222 = scmp.ne.s32.totalorder %s208, %s209
      %p223 = scmp.eq.s32.totalorder %s28, 1
      %p224 = por %p222, %p223
      %p226 = scmp.ne.s32.totalorder %s209, %s225
      %p227 = scmp.eq.s32.totalorder %s28, 0
      %p228 = por %p226, %p227
      %p229 = scmp.le.s32.totalorder 1, %s22
      %p230 = scmp.lt.s32.totalorder %s22, 3
      %p231 = pnand %p229, %p230
      %p232 = pneg %p231
      // Predicated region
      $region9: #{tpu_custom_call.1} parent=5 // pred_check
        _
      $region10: #{tpu_custom_call.1} parent=5 // pred_check_branch
        %234 = sbr.rel (%p231) target = $region12
      $region11: #{tpu_custom_call.1} parent=5 // pred_region
        %s235 = ssub.s32 %s22, 1
        // Predicated region
        $region13: #{tpu_custom_call.1} parent=11 // pred_check
          %p236 = pneg %p69
        $region14: #{tpu_custom_call.1} parent=11 // pred_check_branch
          %238 = sbr.rel (%p236) target = $region16
        $region15: #{tpu_custom_call.1} parent=11 // pred_region
          _
        $region16: #{tpu_custom_call.1} parent=11 // pred_fallthru
          _
        // Predicated region
        $region17: #{tpu_custom_call.1} parent=11 // pred_check
          %p239 = pneg %p90
        $region18: #{tpu_custom_call.1} parent=11 // pred_check_branch
          %241 = sbr.rel (%p239) target = $region20
        $region19: #{tpu_custom_call.1} parent=11 // pred_region
          _
        $region20: #{tpu_custom_call.1} parent=11 // pred_fallthru
          _
        // Predicated region
        $region21: #{tpu_custom_call.1} parent=11 // pred_check
          %p242 = pneg %p111
        $region22: #{tpu_custom_call.1} parent=11 // pred_check_branch
          %244 = sbr.rel (%p242) target = $region24
        $region23: #{tpu_custom_call.1} parent=11 // pred_region
          %s246 = ssub.s32 1536, 1536
          %247 = vsyncadd [#allocation6], %s246
          %s248 = sshll.u32 [#allocation5], 4
          %s249 = int_to_ptr.vmem [resolvable:$true] %s248
          %254 = dma.hbm_to_vmem [thread:$0]  %s3, 1536, %s249, [#allocation6], 64, 64, 4
        $region24: #{tpu_custom_call.1} parent=11 // pred_fallthru
          _
        // Predicated region
        $region25: #{tpu_custom_call.1} parent=11 // pred_check
          %p255 = pneg %p132
        $region26: #{tpu_custom_call.1} parent=11 // pred_check_branch
          %257 = sbr.rel (%p255) target = $region28
        $region27: #{tpu_custom_call.1} parent=11 // pred_region
          _
        $region28: #{tpu_custom_call.1} parent=11 // pred_fallthru
          _
        // Predicated region
        $region29: #{tpu_custom_call.1} parent=11 // pred_check
          %p258 = pneg %p153
        $region30: #{tpu_custom_call.1} parent=11 // pred_check_branch
          %260 = sbr.rel (%p258) target = $region32
        $region31: #{tpu_custom_call.1} parent=11 // pred_region
          _
        $region32: #{tpu_custom_call.1} parent=11 // pred_fallthru
          _
        // Predicated region
        $region33: #{tpu_custom_call.1} parent=11 // pred_check
          %p261 = pneg %p174
        $region34: #{tpu_custom_call.1} parent=11 // pred_check_branch
          %263 = sbr.rel (%p261) target = $region36
        $region35: #{tpu_custom_call.1} parent=11 // pred_region
          %s265 = ssub.s32 1536, 1536
          %266 = vsyncadd [#allocation6], %s265
          %s267 = sshll.u32 [#allocation7], 4
          %s268 = int_to_ptr.vmem [resolvable:$true] %s267
          %273 = dma.hbm_to_vmem [thread:$0]  %s6, 1536, %s268, [#allocation6], 64, 64, 4
        $region36: #{tpu_custom_call.1} parent=11 // pred_fallthru
          _
        // Predicated region
        $region37: #{tpu_custom_call.1} parent=11 // pred_check
          %p274 = pneg %p195
        $region38: #{tpu_custom_call.1} parent=11 // pred_check_branch
          %276 = sbr.rel (%p274) target = $region40
        $region39: #{tpu_custom_call.1} parent=11 // pred_region
          %s278 = ssub.s32 512, 512
          %279 = vsyncadd [#allocation9], %s278
          %s280 = sshll.u32 [#allocation8], 4
          %s281 = int_to_ptr.vmem [resolvable:$true] %s280
          %286 = dma.hbm_to_vmem [thread:$0]  %s7, 512, %s281, [#allocation9], 64, 64, 4
        $region40: #{tpu_custom_call.1} parent=11 // pred_fallthru
          _
      $region12: #{tpu_custom_call.1} parent=5 // pred_fallthru
        _
      %p287 = scmp.lt.s32.totalorder %s22, 2
      // Predicated region
      $region41: #{tpu_custom_call.1} parent=5 // pred_check
        %p288 = pneg %p287
      $region42: #{tpu_custom_call.1} parent=5 // pred_check_branch
        %290 = sbr.rel (%p288) target = $region44
      $region43: #{tpu_custom_call.1} parent=5 // pred_region
        // Predicated region
        $region45: #{tpu_custom_call.1} parent=43 // pred_check
          %p291 = pneg %p42
        $region46: #{tpu_custom_call.1} parent=43 // pred_check_branch
          %293 = sbr.rel (%p291) target = $region48
        $region47: #{tpu_custom_call.1} parent=43 // pred_region
          %s294 = sand.u32 %s32, 1
          %s295 = scalar_lea.sflag [#allocation3], %s294
          %s296 = sand.u32 %s32, 1
          %s297 = smul.addr %s296, 16
          %s298 = scalar_lea.vmem [#allocation2], %s297
          %s300 = ssub.s32 256, 256
          %301 = vsyncadd %s295, %s300
          %s302 = smul.addr %s22, 2
          %s303 = smul.addr %s302, 128
          %s304 = scalar_lea.hbm %s0, %s303
          %s305 = sshll.u32 %s298, 4
          %s306 = int_to_ptr.vmem [resolvable:$true] %s305
          %311 = dma.hbm_to_vmem [thread:$0]  %s304, 256, %s306, %s295, 128, 128, 8
        $region48: #{tpu_custom_call.1} parent=43 // pred_fallthru
          _
      $region44: #{tpu_custom_call.1} parent=5 // pred_fallthru
        _
      %p312 = scmp.le.s32.totalorder 1, %s22
      %p313 = scmp.lt.s32.totalorder %s22, 3
      %p314 = pnand %p312, %p313
      %p315 = pneg %p314
      // Predicated region
      $region49: #{tpu_custom_call.1} parent=5 // pred_check
        _
      $region50: #{tpu_custom_call.1} parent=5 // pred_check_branch
        %317 = sbr.rel (%p314) target = $region52
      $region51: #{tpu_custom_call.1} parent=5 // pred_region
        %s318 = ssub.s32 %s22, 1
        %s319 = sand.u32 %s35, 1
        %s320 = scalar_lea.sflag [#allocation3], %s319
        %s321 = sand.u32 %s35, 1
        %s322 = smul.addr %s321, 16
        %s323 = scalar_lea.vmem [#allocation2], %s322
        // Predicated region
        $region53: #{tpu_custom_call.1} parent=51 // pred_check
          %p324 = pneg %p48
        $region54: #{tpu_custom_call.1} parent=51 // pred_check_branch
          %326 = sbr.rel (%p324) target = $region56
        $region55: #{tpu_custom_call.1} parent=51 // pred_region
          %327 = dma.done %s320, 256
        $region56: #{tpu_custom_call.1} parent=51 // pred_fallthru
          _
        // Predicated region
        $region57: #{tpu_custom_call.1} parent=51 // pred_check
          %p328 = pneg %p111
        $region58: #{tpu_custom_call.1} parent=51 // pred_check_branch
          %330 = sbr.rel (%p328) target = $region60
        $region59: #{tpu_custom_call.1} parent=51 // pred_region
          %331 = dma.done [#allocation6], 1536
        $region60: #{tpu_custom_call.1} parent=51 // pred_fallthru
          _
        // Predicated region
        $region61: #{tpu_custom_call.1} parent=51 // pred_check
          %p332 = pneg %p174
        $region62: #{tpu_custom_call.1} parent=51 // pred_check_branch
          %334 = sbr.rel (%p332) target = $region64
        $region63: #{tpu_custom_call.1} parent=51 // pred_region
          %335 = dma.done [#allocation6], 1536
        $region64: #{tpu_custom_call.1} parent=51 // pred_fallthru
          _
        // Predicated region
        $region65: #{tpu_custom_call.1} parent=51 // pred_check
          %p336 = pneg %p195
        $region66: #{tpu_custom_call.1} parent=51 // pred_check_branch
          %338 = sbr.rel (%p336) target = $region68
        $region67: #{tpu_custom_call.1} parent=51 // pred_region
          %339 = dma.done [#allocation9], 512
        $region68: #{tpu_custom_call.1} parent=51 // pred_fallthru
          _
        %s340 = sand.u32 %s35, 1
        %s341 = scalar_lea.sflag [#allocation3], %s340
        %s342 = sand.u32 %s35, 1
        %s343 = smul.addr %s342, 16
        %s344 = scalar_lea.vmem [#allocation2], %s343
        %p345 = pneg %p48
        %p346 = pneg %p45
        %p347 = pneg %p69
        %p348 = pneg %p66
        %p349 = pneg %p90
        %p350 = pneg %p87
        %p351 = pneg %p111
        %p352 = pneg %p108
        %p353 = pneg %p132
        %p354 = pneg %p129
        %p355 = pneg %p153
        %p356 = pneg %p150
        %p357 = pneg %p174
        %p358 = pneg %p171
        %p359 = pneg %p195
        %p360 = pneg %p192
        %p361 = pneg %p221
        %p362 = pneg %p218
        %s363 = sand.u32 %s208, 1
        %s364 = scalar_lea.sflag [#allocation4], %s363
        %s365 = sand.u32 %s208, 1
        %s366 = smul.addr %s365, 8
        %s367 = scalar_lea.vmem [#allocation10], %s366
        %v369 = vld [vmem:[%s323] sm:$0xff]
        %v370 = vld [vmem:[%s323 + $0x8] sm:$0xff]
        %v371 = vld [vmem:[%s1] sm:$0x1]
        %v373 = vlaneseq
        %v374 = vshrl.u32 %v373, 7
        %v375 = vsub.s32 0, %v374
        %v376 = vrot.slane %v371, %v375
        %v378 = vmul.f32 %v369, %v376
        %v379 = vmul.f32 %v370, %v376
        %v380 = vld [vmem:[%s2] sm:$0x1]
        %v382 = vlaneseq
        %v383 = vshrl.u32 %v382, 7
        %v384 = vsub.s32 0, %v383
        %v385 = vrot.slane %v380, %v384
        %v387 = vadd.f32 %v378, %v385
        %v388 = vadd.f32 %v379, %v385
        %v389 = vmax.f32 %v387, 0.0
        %v390 = vmax.f32 %v388, 0.0
        %v391 = vpack.c.bf16 %v390, %v389
        %v392 = vlaneseq
        %v393 = vshrl.u32 %v392, 7
        %v394 = vlaneseq
        %v395 = vand.u32 %v394, 127
        %v396 = vmul.u32 %v393, 2
        %v397 = vadd.s32 %v396, 4294967295
        %vm398 = vcmp.eq.s32.totalorder %v395, %v397
        %v399 = vsel %vm398, 1.0, 0.0
        %v400 = vpack.c.bf16 %v399, %v399
        %vm401 = vcmask 130048
        %v403 = vsel %vm401, %v400, 0
        %405 = vmatprep.subr.bf16.mxu0 0
        %406 = vmatpush1.bf16.msra.mxu0 %v391
        %407 = vmatprep.subr.bf16.mxu0 0
        %408 = vmatpush1.bf16.msra.mxu0 0
        %409 = vmatprep.subr.bf16.mxu0 0
        %410 = vmatpush1.bf16.msra.mxu0 0
        %411 = vmatprep.subr.bf16.mxu0 0
        %412 = vmatpush1.bf16.msra.mxu0 0
        %413 = vmatprep.subr.bf16.mxu0 0
        %414 = vmatpush1.bf16.msra.mxu0 0
        %415 = vmatprep.subr.bf16.mxu0 0
        %416 = vmatpush1.bf16.msra.mxu0 0
        %417 = vmatprep.subr.bf16.mxu0 0
        %418 = vmatpush1.bf16.msra.mxu0 0
        %419 = vmatprep.subr.bf16.mxu0 0
        %420 = vmatpush1.bf16.msra.mxu0 0
        %421 = vmatprep.subr.bf16.mxu0 0
        %422 = vmatpush1.bf16.msra.mxu0 0
        %423 = vmatprep.subr.bf16.mxu0 0
        %424 = vmatpush1.bf16.msra.mxu0 0
        %425 = vmatprep.subr.bf16.mxu0 0
        %426 = vmatpush1.bf16.msra.mxu0 0
        %427 = vmatprep.subr.bf16.mxu0 0
        %428 = vmatpush1.bf16.msra.mxu0 0
        %429 = vmatprep.subr.bf16.mxu0 0
        %430 = vmatpush1.bf16.msra.mxu0 0
        %431 = vmatprep.subr.bf16.mxu0 0
        %432 = vmatpush1.bf16.msra.mxu0 0
        %433 = vmatprep.subr.bf16.mxu0 0
        %434 = vmatpush1.bf16.msra.mxu0 0
        %435 = vmatprep.subr.bf16.mxu0 0
        %436 = vmatpush1.bf16.msra.mxu0 0
        %437 = vmatprep.mubr.bf16.mxu0 0
        %438 = vmatmul.mubr.bf16.gmra.mrb[0].mxu0 %v403
        %v439 = vpop.f32.mrb[0].mxu0
        %v440 = vadd.f32 0.0, %v439
        %v441 = vpop.f32.mrb[0].mxu0
        %v442 = vpop.f32.mrb[0].mxu0
        %v443 = vpop.f32.mrb[0].mxu0
        %444 = vdwg.mxu0
        %v445 = vpack.c.bf16 %v440, %v440
        %v446 = vld [vmem:[#allocation5] sm:$0xf]
        %v447 = vld [vmem:[#allocation5 + $0x4] sm:$0xf]
        %v448 = vld [vmem:[#allocation5 + $0x8] sm:$0xf]
        %v449 = vld [vmem:[#allocation5 + $0xc] sm:$0xf]
        %v450 = vld [vmem:[#allocation5 + $0x10] sm:$0xf]
        %v451 = vld [vmem:[#allocation5 + $0x14] sm:$0xf]
        %v452 = vld [vmem:[#allocation5 + $0x18] sm:$0xf]
        %v453 = vld [vmem:[#allocation5 + $0x1c] sm:$0xf]
        %vm454 = vcmp.eq.s32.totalorder %v395, %v396
        %v455 = vsel %vm454, 1.0, 0.0
        %v456 = vpack.c.bf16 %v455, %v455
        %v458 = vsel %vm401, %v456, 0
        %460 = vmatprep.subr.bf16.mxu0 0
        %461 = vmatpush1.bf16.msra.mxu0 %v391
        %462 = vmatprep.subr.bf16.mxu0 0
        %463 = vmatpush1.bf16.msra.mxu0 0
        %464 = vmatprep.subr.bf16.mxu0 0
        %465 = vmatpush1.bf16.msra.mxu0 0
        %466 = vmatprep.subr.bf16.mxu0 0
        %467 = vmatpush1.bf16.msra.mxu0 0
        %468 = vmatprep.subr.bf16.mxu0 0
        %469 = vmatpush1.bf16.msra.mxu0 0
        %470 = vmatprep.subr.bf16.mxu0 0
        %471 = vmatpush1.bf16.msra.mxu0 0
        %472 = vmatprep.subr.bf16.mxu0 0
        %473 = vmatpush1.bf16.msra.mxu0 0
        %474 = vmatprep.subr.bf16.mxu0 0
        %475 = vmatpush1.bf16.msra.mxu0 0
        %476 = vmatprep.subr.bf16.mxu0 0
        %477 = vmatpush1.bf16.msra.mxu0 0
        %478 = vmatprep.subr.bf16.mxu0 0
        %479 = vmatpush1.bf16.msra.mxu0 0
        %480 = vmatprep.subr.bf16.mxu0 0
        %481 = vmatpush1.bf16.msra.mxu0 0
        %482 = vmatprep.subr.bf16.mxu0 0
        %483 = vmatpush1.bf16.msra.mxu0 0
        %484 = vmatprep.subr.bf16.mxu0 0
        %485 = vmatpush1.bf16.msra.mxu0 0
        %486 = vmatprep.subr.bf16.mxu0 0
        %487 = vmatpush1.bf16.msra.mxu0 0
        %488 = vmatprep.subr.bf16.mxu0 0
        %489 = vmatpush1.bf16.msra.mxu0 0
        %490 = vmatprep.subr.bf16.mxu0 0
        %491 = vmatpush1.bf16.msra.mxu0 0
        %492 = vmatprep.mubr.bf16.mxu0 0
        %493 = vmatmul.mubr.bf16.gmra.mrb[0].mxu0 %v458
        %v494 = vpop.f32.mrb[0].mxu0
        %v495 = vadd.f32 0.0, %v494
        %v496 = vpop.f32.mrb[0].mxu0
        %v497 = vpop.f32.mrb[0].mxu0
        %v498 = vpop.f32.mrb[0].mxu0
        %499 = vdwg.mxu0
        %v500 = vpack.c.bf16 %v495, %v495
        %s501 = scalar_lea.vmem [#allocation5], 32
        %v502 = vld [vmem:[%s501] sm:$0xf]
        %v503 = vld [vmem:[%s501 + $0x4] sm:$0xf]
        %v504 = vld [vmem:[%s501 + $0x8] sm:$0xf]
        %v505 = vld [vmem:[%s501 + $0xc] sm:$0xf]
        %v506 = vld [vmem:[%s501 + $0x10] sm:$0xf]
        %v507 = vld [vmem:[%s501 + $0x14] sm:$0xf]
        %v508 = vld [vmem:[%s501 + $0x18] sm:$0xf]
        %v509 = vld [vmem:[%s501 + $0x1c] sm:$0xf]
        %v518 = vunpack.c.l.b16 %v502
        %v519 = vunpack.c.l.b16 %v503
        %v520 = vunpack.c.l.b16 %v504
        %v521 = vunpack.c.l.b16 %v505
        %v522 = vunpack.c.l.b16 %v506
        %v523 = vunpack.c.l.b16 %v507
        %v524 = vunpack.c.l.b16 %v508
        %v525 = vunpack.c.l.b16 %v509
        %v526 = vpack.c.b16 %v519, %v518
        %v527 = vpack.c.b16 %v521, %v520
        %v528 = vpack.c.b16 %v523, %v522
        %v529 = vpack.c.b16 %v525, %v524
        %vm534 = vcmask 523264
        %v536 = vsel %vm534, %v500, 0
        %538 = vmatprep.subr.bf16.mxu0 0
        %539 = vmatpush1.bf16.msra.mxu0 %v526
        %540 = vmatprep.subr.bf16.mxu0 0
        %541 = vmatpush1.bf16.msra.mxu0 %v527
        %542 = vmatprep.subr.bf16.mxu0 0
        %543 = vmatpush1.bf16.msra.mxu0 %v528
        %544 = vmatprep.subr.bf16.mxu0 0
        %545 = vmatpush1.bf16.msra.mxu0 %v529
        %546 = vmatprep.subr.bf16.mxu0 0
        %547 = vmatpush1.bf16.msra.mxu0 0
        %548 = vmatprep.subr.bf16.mxu0 0
        %549 = vmatpush1.bf16.msra.mxu0 0
        %550 = vmatprep.subr.bf16.mxu0 0
        %551 = vmatpush1.bf16.msra.mxu0 0
        %552 = vmatprep.subr.bf16.mxu0 0
        %553 = vmatpush1.bf16.msra.mxu0 0
        %554 = vmatprep.subr.bf16.mxu0 0
        %555 = vmatpush1.bf16.msra.mxu0 0
        %556 = vmatprep.subr.bf16.mxu0 0
        %557 = vmatpush1.bf16.msra.mxu0 0
        %558 = vmatprep.subr.bf16.mxu0 0
        %559 = vmatpush1.bf16.msra.mxu0 0
        %560 = vmatprep.subr.bf16.mxu0 0
        %561 = vmatpush1.bf16.msra.mxu0 0
        %562 = vmatprep.subr.bf16.mxu0 0
        %563 = vmatpush1.bf16.msra.mxu0 0
        %564 = vmatprep.subr.bf16.mxu0 0
        %565 = vmatpush1.bf16.msra.mxu0 0
        %566 = vmatprep.subr.bf16.mxu0 0
        %567 = vmatpush1.bf16.msra.mxu0 0
        %568 = vmatprep.subr.bf16.mxu0 0
        %569 = vmatpush1.bf16.msra.mxu0 0
        %570 = vmatprep.mubr.bf16.mxu0 0
        %571 = vmatmul.mubr.bf16.gmra.mrb[0].mxu0 %v536
        %v572 = vpop.f32.mrb[0].mxu0
        %v573 = vadd.f32 0.0, %v572
        %v574 = vpop.f32.mrb[0].mxu0
        %v575 = vpop.f32.mrb[0].mxu0
        %v576 = vpop.f32.mrb[0].mxu0
        %577 = vdwg.mxu0
        %v586 = vunpack.c.l.b16 %v446
        %v587 = vunpack.c.l.b16 %v447
        %v588 = vunpack.c.l.b16 %v448
        %v589 = vunpack.c.l.b16 %v449
        %v590 = vunpack.c.l.b16 %v450
        %v591 = vunpack.c.l.b16 %v451
        %v592 = vunpack.c.l.b16 %v452
        %v593 = vunpack.c.l.b16 %v453
        %v594 = vpack.c.b16 %v587, %v586
        %v595 = vpack.c.b16 %v589, %v588
        %v596 = vpack.c.b16 %v591, %v590
        %v597 = vpack.c.b16 %v593, %v592
        %v603 = vsel %vm534, %v445, 0
        %605 = vmatprep.subr.bf16.mxu0 0
        %606 = vmatpush1.bf16.msra.mxu0 %v594
        %607 = vmatprep.subr.bf16.mxu0 0
        %608 = vmatpush1.bf16.msra.mxu0 %v595
        %609 = vmatprep.subr.bf16.mxu0 0
        %610 = vmatpush1.bf16.msra.mxu0 %v596
        %611 = vmatprep.subr.bf16.mxu0 0
        %612 = vmatpush1.bf16.msra.mxu0 %v597
        %613 = vmatprep.subr.bf16.mxu0 0
        %614 = vmatpush1.bf16.msra.mxu0 0
        %615 = vmatprep.subr.bf16.mxu0 0
        %616 = vmatpush1.bf16.msra.mxu0 0
        %617 = vmatprep.subr.bf16.mxu0 0
        %618 = vmatpush1.bf16.msra.mxu0 0
        %619 = vmatprep.subr.bf16.mxu0 0
        %620 = vmatpush1.bf16.msra.mxu0 0
        %621 = vmatprep.subr.bf16.mxu0 0
        %622 = vmatpush1.bf16.msra.mxu0 0
        %623 = vmatprep.subr.bf16.mxu0 0
        %624 = vmatpush1.bf16.msra.mxu0 0
        %625 = vmatprep.subr.bf16.mxu0 0
        %626 = vmatpush1.bf16.msra.mxu0 0
        %627 = vmatprep.subr.bf16.mxu0 0
        %628 = vmatpush1.bf16.msra.mxu0 0
        %629 = vmatprep.subr.bf16.mxu0 0
        %630 = vmatpush1.bf16.msra.mxu0 0
        %631 = vmatprep.subr.bf16.mxu0 0
        %632 = vmatpush1.bf16.msra.mxu0 0
        %633 = vmatprep.subr.bf16.mxu0 0
        %634 = vmatpush1.bf16.msra.mxu0 0
        %635 = vmatprep.subr.bf16.mxu0 0
        %636 = vmatpush1.bf16.msra.mxu0 0
        %637 = vmatprep.mubr.bf16.mxu0 0
        %638 = vmatmul.mubr.bf16.gmra.mrb[0].mxu0 %v603
        %v639 = vpop.f32.mrb[0].mxu0
        %v640 = vadd.f32 %v573, %v639
        %v641 = vpop.f32.mrb[0].mxu0
        %v642 = vpop.f32.mrb[0].mxu0
        %v643 = vpop.f32.mrb[0].mxu0
        %644 = vdwg.mxu0
        %v645 = vld [vmem:[#allocation8] sm:$0xf]
        %v646 = vld [vmem:[#allocation8 + $0x4] sm:$0xf]
        %v647 = vld [vmem:[#allocation8 + $0x8] sm:$0xf]
        %v648 = vld [vmem:[#allocation8 + $0xc] sm:$0xf]
        %v649 = vld [vmem:[#allocation8 + $0x10] sm:$0xf]
        %v650 = vld [vmem:[#allocation8 + $0x14] sm:$0xf]
        %v651 = vld [vmem:[#allocation8 + $0x18] sm:$0xf]
        %v652 = vld [vmem:[#allocation8 + $0x1c] sm:$0xf]
        %v661 = vunpack.c.l.b16 %v645
        %v662 = vunpack.c.l.b16 %v646
        %v663 = vunpack.c.l.b16 %v647
        %v664 = vunpack.c.l.b16 %v648
        %v665 = vunpack.c.l.b16 %v649
        %v666 = vunpack.c.l.b16 %v650
        %v667 = vunpack.c.l.b16 %v651
        %v668 = vunpack.c.l.b16 %v652
        %v669 = vpack.c.b16 %v662, %v661
        %v670 = vpack.c.b16 %v664, %v663
        %v671 = vpack.c.b16 %v666, %v665
        %v672 = vpack.c.b16 %v668, %v667
        %677 = vmatprep.subr.bf16.mxu0 0
        %678 = vmatpush1.bf16.msra.mxu0 %v669
        %679 = vmatprep.subr.bf16.mxu0 0
        %680 = vmatpush1.bf16.msra.mxu0 %v670
        %681 = vmatprep.subr.bf16.mxu0 0
        %682 = vmatpush1.bf16.msra.mxu0 %v671
        %683 = vmatprep.subr.bf16.mxu0 0
        %684 = vmatpush1.bf16.msra.mxu0 %v672
        %685 = vmatprep.subr.bf16.mxu0 0
        %686 = vmatpush1.bf16.msra.mxu0 0
        %687 = vmatprep.subr.bf16.mxu0 0
        %688 = vmatpush1.bf16.msra.mxu0 0
        %689 = vmatprep.subr.bf16.mxu0 0
        %690 = vmatpush1.bf16.msra.mxu0 0
        %691 = vmatprep.subr.bf16.mxu0 0
        %692 = vmatpush1.bf16.msra.mxu0 0
        %693 = vmatprep.subr.bf16.mxu0 0
        %694 = vmatpush1.bf16.msra.mxu0 0
        %695 = vmatprep.subr.bf16.mxu0 0
        %696 = vmatpush1.bf16.msra.mxu0 0
        %697 = vmatprep.subr.bf16.mxu0 0
        %698 = vmatpush1.bf16.msra.mxu0 0
        %699 = vmatprep.subr.bf16.mxu0 0
        %700 = vmatpush1.bf16.msra.mxu0 0
        %701 = vmatprep.subr.bf16.mxu0 0
        %702 = vmatpush1.bf16.msra.mxu0 0
        %703 = vmatprep.subr.bf16.mxu0 0
        %704 = vmatpush1.bf16.msra.mxu0 0
        %705 = vmatprep.subr.bf16.mxu0 0
        %706 = vmatpush1.bf16.msra.mxu0 0
        %707 = vmatprep.subr.bf16.mxu0 0
        %708 = vmatpush1.bf16.msra.mxu0 0
        %709 = vmatprep.mubr.bf16.mxu0 0
        %710 = vmatmul.mubr.bf16.gmra.mrb[0].mxu0 %v536
        %v711 = vpop.f32.mrb[0].mxu0
        %v712 = vadd.f32 0.0, %v711
        %v713 = vpop.f32.mrb[0].mxu0
        %v714 = vpop.f32.mrb[0].mxu0
        %v715 = vpop.f32.mrb[0].mxu0
        %716 = vdwg.mxu0
        %v717 = vadd.s32 %v396, 1
        %vm718 = vcmp.eq.s32.totalorder %v395, %v717
        %v719 = vsel %vm718, 1.0, 0.0
        %v720 = vpack.c.bf16 %v719, %v719
        %v722 = vsel %vm401, %v720, 0
        %724 = vmatprep.subr.bf16.mxu0 0
        %725 = vmatpush1.bf16.msra.mxu0 %v391
        %726 = vmatprep.subr.bf16.mxu0 0
        %727 = vmatpush1.bf16.msra.mxu0 0
        %728 = vmatprep.subr.bf16.mxu0 0
        %729 = vmatpush1.bf16.msra.mxu0 0
        %730 = vmatprep.subr.bf16.mxu0 0
        %731 = vmatpush1.bf16.msra.mxu0 0
        %732 = vmatprep.subr.bf16.mxu0 0
        %733 = vmatpush1.bf16.msra.mxu0 0
        %734 = vmatprep.subr.bf16.mxu0 0
        %735 = vmatpush1.bf16.msra.mxu0 0
        %736 = vmatprep.subr.bf16.mxu0 0
        %737 = vmatpush1.bf16.msra.mxu0 0
        %738 = vmatprep.subr.bf16.mxu0 0
        %739 = vmatpush1.bf16.msra.mxu0 0
        %740 = vmatprep.subr.bf16.mxu0 0
        %741 = vmatpush1.bf16.msra.mxu0 0
        %742 = vmatprep.subr.bf16.mxu0 0
        %743 = vmatpush1.bf16.msra.mxu0 0
        %744 = vmatprep.subr.bf16.mxu0 0
        %745 = vmatpush1.bf16.msra.mxu0 0
        %746 = vmatprep.subr.bf16.mxu0 0
        %747 = vmatpush1.bf16.msra.mxu0 0
        %748 = vmatprep.subr.bf16.mxu0 0
        %749 = vmatpush1.bf16.msra.mxu0 0
        %750 = vmatprep.subr.bf16.mxu0 0
        %751 = vmatpush1.bf16.msra.mxu0 0
        %752 = vmatprep.subr.bf16.mxu0 0
        %753 = vmatpush1.bf16.msra.mxu0 0
        %754 = vmatprep.subr.bf16.mxu0 0
        %755 = vmatpush1.bf16.msra.mxu0 0
        %756 = vmatprep.mubr.bf16.mxu0 0
        %757 = vmatmul.mubr.bf16.gmra.mrb[0].mxu0 %v722
        %v758 = vpop.f32.mrb[0].mxu0
        %v759 = vadd.f32 0.0, %v758
        %v760 = vpop.f32.mrb[0].mxu0
        %v761 = vpop.f32.mrb[0].mxu0
        %v762 = vpop.f32.mrb[0].mxu0
        %763 = vdwg.mxu0
        %v764 = vpack.c.bf16 %v759, %v759
        %s765 = scalar_lea.vmem [#allocation5], 64
        %v766 = vld [vmem:[%s765] sm:$0xf]
        %v767 = vld [vmem:[%s765 + $0x4] sm:$0xf]
        %v768 = vld [vmem:[%s765 + $0x8] sm:$0xf]
        %v769 = vld [vmem:[%s765 + $0xc] sm:$0xf]
        %v770 = vld [vmem:[%s765 + $0x10] sm:$0xf]
        %v771 = vld [vmem:[%s765 + $0x14] sm:$0xf]
        %v772 = vld [vmem:[%s765 + $0x18] sm:$0xf]
        %v773 = vld [vmem:[%s765 + $0x1c] sm:$0xf]
        %v782 = vunpack.c.l.b16 %v766
        %v783 = vunpack.c.l.b16 %v767
        %v784 = vunpack.c.l.b16 %v768
        %v785 = vunpack.c.l.b16 %v769
        %v786 = vunpack.c.l.b16 %v770
        %v787 = vunpack.c.l.b16 %v771
        %v788 = vunpack.c.l.b16 %v772
        %v789 = vunpack.c.l.b16 %v773
        %v790 = vpack.c.b16 %v783, %v782
        %v791 = vpack.c.b16 %v785, %v784
        %v792 = vpack.c.b16 %v787, %v786
        %v793 = vpack.c.b16 %v789, %v788
        %v799 = vsel %vm534, %v764, 0
        %801 = vmatprep.subr.bf16.mxu0 0
        %802 = vmatpush1.bf16.msra.mxu0 %v790
        %803 = vmatprep.subr.bf16.mxu0 0
        %804 = vmatpush1.bf16.msra.mxu0 %v791
        %805 = vmatprep.subr.bf16.mxu0 0
        %806 = vmatpush1.bf16.msra.mxu0 %v792
        %807 = vmatprep.subr.bf16.mxu0 0
        %808 = vmatpush1.bf16.msra.mxu0 %v793
        %809 = vmatprep.subr.bf16.mxu0 0
        %810 = vmatpush1.bf16.msra.mxu0 0
        %811 = vmatprep.subr.bf16.mxu0 0
        %812 = vmatpush1.bf16.msra.mxu0 0
        %813 = vmatprep.subr.bf16.mxu0 0
        %814 = vmatpush1.bf16.msra.mxu0 0
        %815 = vmatprep.subr.bf16.mxu0 0
        %816 = vmatpush1.bf16.msra.mxu0 0
        %817 = vmatprep.subr.bf16.mxu0 0
        %818 = vmatpush1.bf16.msra.mxu0 0
        %819 = vmatprep.subr.bf16.mxu0 0
        %820 = vmatpush1.bf16.msra.mxu0 0
        %821 = vmatprep.subr.bf16.mxu0 0
        %822 = vmatpush1.bf16.msra.mxu0 0
        %823 = vmatprep.subr.bf16.mxu0 0
        %824 = vmatpush1.bf16.msra.mxu0 0
        %825 = vmatprep.subr.bf16.mxu0 0
        %826 = vmatpush1.bf16.msra.mxu0 0
        %827 = vmatprep.subr.bf16.mxu0 0
        %828 = vmatpush1.bf16.msra.mxu0 0
        %829 = vmatprep.subr.bf16.mxu0 0
        %830 = vmatpush1.bf16.msra.mxu0 0
        %831 = vmatprep.subr.bf16.mxu0 0
        %832 = vmatpush1.bf16.msra.mxu0 0
        %833 = vmatprep.mubr.bf16.mxu0 0
        %834 = vmatmul.mubr.bf16.gmra.mrb[0].mxu0 %v799
        %v835 = vpop.f32.mrb[0].mxu0
        %v836 = vadd.f32 0.0, %v835
        %v837 = vpop.f32.mrb[0].mxu0
        %v838 = vpop.f32.mrb[0].mxu0
        %v839 = vpop.f32.mrb[0].mxu0
        %840 = vdwg.mxu0
        %v841 = vadd.f32 %v640, %v836
        %v842 = vld [vmem:[%s4] sm:$0x1]
        %v844 = vlaneseq
        %v845 = vshrl.u32 %v844, 7
        %v846 = vsub.s32 0, %v845
        %v847 = vrot.slane %v842, %v846
        %v849 = vmul.f32 %v841, %v847
        %v850 = vld [vmem:[%s5] sm:$0x1]
        %v852 = vlaneseq
        %v853 = vshrl.u32 %v852, 7
        %v854 = vsub.s32 0, %v853
        %v855 = vrot.slane %v850, %v854
        %v857 = vadd.f32 %v849, %v855
        %v858 = vmax.f32 %v857, 0.0
        %v859 = vpack.c.bf16 %v858, %v858
        %v860 = vadd.s32 %v393, 4294967295
        %vm861 = vcmp.eq.s32.totalorder %v395, %v860
        %v862 = vsel %vm861, 1.0, 0.0
        %v863 = vpack.c.bf16 %v862, %v862
        %vm864 = vcmask 64512
        %v866 = vsel %vm864, %v863, 0
        %vm868 = vcmask 1043456
        %v870 = vsel %vm868, %v859, 0
        %872 = vmatprep.subr.bf16.mxu0 0
        %873 = vmatpush1.bf16.msra.mxu0 %v870
        %874 = vmatprep.subr.bf16.mxu0 0
        %875 = vmatpush1.bf16.msra.mxu0 0
        %876 = vmatprep.subr.bf16.mxu0 0
        %877 = vmatpush1.bf16.msra.mxu0 0
        %878 = vmatprep.subr.bf16.mxu0 0
        %879 = vmatpush1.bf16.msra.mxu0 0
        %880 = vmatprep.subr.bf16.mxu0 0
        %881 = vmatpush1.bf16.msra.mxu0 0
        %882 = vmatprep.subr.bf16.mxu0 0
        %883 = vmatpush1.bf16.msra.mxu0 0
        %884 = vmatprep.subr.bf16.mxu0 0
        %885 = vmatpush1.bf16.msra.mxu0 0
        %886 = vmatprep.subr.bf16.mxu0 0
        %887 = vmatpush1.bf16.msra.mxu0 0
        %888 = vmatprep.subr.bf16.mxu0 0
        %889 = vmatpush1.bf16.msra.mxu0 0
        %890 = vmatprep.subr.bf16.mxu0 0
        %891 = vmatpush1.bf16.msra.mxu0 0
        %892 = vmatprep.subr.bf16.mxu0 0
        %893 = vmatpush1.bf16.msra.mxu0 0
        %894 = vmatprep.subr.bf16.mxu0 0
        %895 = vmatpush1.bf16.msra.mxu0 0
        %896 = vmatprep.subr.bf16.mxu0 0
        %897 = vmatpush1.bf16.msra.mxu0 0
        %898 = vmatprep.subr.bf16.mxu0 0
        %899 = vmatpush1.bf16.msra.mxu0 0
        %900 = vmatprep.subr.bf16.mxu0 0
        %901 = vmatpush1.bf16.msra.mxu0 0
        %902 = vmatprep.subr.bf16.mxu0 0
        %903 = vmatpush1.bf16.msra.mxu0 0
        %904 = vmatprep.mubr.bf16.mxu0 0
        %905 = vmatmul.mubr.bf16.gmra.mrb[0].mxu0 %v866
        %v906 = vpop.f32.mrb[0].mxu0
        %v907 = vadd.f32 0.0, %v906
        %v908 = vpop.f32.mrb[0].mxu0
        %v909 = vpop.f32.mrb[0].mxu0
        %v910 = vpop.f32.mrb[0].mxu0
        %911 = vdwg.mxu0
        %v912 = vpack.c.bf16 %v907, %v907
        %v913 = vld [vmem:[#allocation7] sm:$0xf]
        %v914 = vld [vmem:[#allocation7 + $0x4] sm:$0xf]
        %v915 = vld [vmem:[#allocation7 + $0x8] sm:$0xf]
        %v916 = vld [vmem:[#allocation7 + $0xc] sm:$0xf]
        %v917 = vld [vmem:[#allocation7 + $0x10] sm:$0xf]
        %v918 = vld [vmem:[#allocation7 + $0x14] sm:$0xf]
        %v919 = vld [vmem:[#allocation7 + $0x18] sm:$0xf]
        %v920 = vld [vmem:[#allocation7 + $0x1c] sm:$0xf]
        %vm921 = vcmp.eq.s32.totalorder %v395, %v393
        %v922 = vsel %vm921, 1.0, 0.0
        %v923 = vpack.c.bf16 %v922, %v922
        %v925 = vsel %vm864, %v923, 0
        %927 = vmatprep.subr.bf16.mxu0 0
        %928 = vmatpush1.bf16.msra.mxu0 %v870
        %929 = vmatprep.subr.bf16.mxu0 0
        %930 = vmatpush1.bf16.msra.mxu0 0
        %931 = vmatprep.subr.bf16.mxu0 0
        %932 = vmatpush1.bf16.msra.mxu0 0
        %933 = vmatprep.subr.bf16.mxu0 0
        %934 = vmatpush1.bf16.msra.mxu0 0
        %935 = vmatprep.subr.bf16.mxu0 0
        %936 = vmatpush1.bf16.msra.mxu0 0
        %937 = vmatprep.subr.bf16.mxu0 0
        %938 = vmatpush1.bf16.msra.mxu0 0
        %939 = vmatprep.subr.bf16.mxu0 0
        %940 = vmatpush1.bf16.msra.mxu0 0
        %941 = vmatprep.subr.bf16.mxu0 0
        %942 = vmatpush1.bf16.msra.mxu0 0
        %943 = vmatprep.subr.bf16.mxu0 0
        %944 = vmatpush1.bf16.msra.mxu0 0
        %945 = vmatprep.subr.bf16.mxu0 0
        %946 = vmatpush1.bf16.msra.mxu0 0
        %947 = vmatprep.subr.bf16.mxu0 0
        %948 = vmatpush1.bf16.msra.mxu0 0
        %949 = vmatprep.subr.bf16.mxu0 0
        %950 = vmatpush1.bf16.msra.mxu0 0
        %951 = vmatprep.subr.bf16.mxu0 0
        %952 = vmatpush1.bf16.msra.mxu0 0
        %953 = vmatprep.subr.bf16.mxu0 0
        %954 = vmatpush1.bf16.msra.mxu0 0
        %955 = vmatprep.subr.bf16.mxu0 0
        %956 = vmatpush1.bf16.msra.mxu0 0
        %957 = vmatprep.subr.bf16.mxu0 0
        %958 = vmatpush1.bf16.msra.mxu0 0
        %959 = vmatprep.mubr.bf16.mxu0 0
        %960 = vmatmul.mubr.bf16.gmra.mrb[0].mxu0 %v925
        %v961 = vpop.f32.mrb[0].mxu0
        %v962 = vadd.f32 0.0, %v961
        %v963 = vpop.f32.mrb[0].mxu0
        %v964 = vpop.f32.mrb[0].mxu0
        %v965 = vpop.f32.mrb[0].mxu0
        %966 = vdwg.mxu0
        %v967 = vpack.c.bf16 %v962, %v962
        %s968 = scalar_lea.vmem [#allocation7], 32
        %v969 = vld [vmem:[%s968] sm:$0xf]
        %v970 = vld [vmem:[%s968 + $0x4] sm:$0xf]
        %v971 = vld [vmem:[%s968 + $0x8] sm:$0xf]
        %v972 = vld [vmem:[%s968 + $0xc] sm:$0xf]
        %v973 = vld [vmem:[%s968 + $0x10] sm:$0xf]
        %v974 = vld [vmem:[%s968 + $0x14] sm:$0xf]
        %v975 = vld [vmem:[%s968 + $0x18] sm:$0xf]
        %v976 = vld [vmem:[%s968 + $0x1c] sm:$0xf]
        %v985 = vunpack.c.l.b16 %v969
        %v986 = vunpack.c.l.b16 %v970
        %v987 = vunpack.c.l.b16 %v971
        %v988 = vunpack.c.l.b16 %v972
        %v989 = vunpack.c.l.b16 %v973
        %v990 = vunpack.c.l.b16 %v974
        %v991 = vunpack.c.l.b16 %v975
        %v992 = vunpack.c.l.b16 %v976
        %v993 = vpack.c.b16 %v986, %v985
        %v994 = vpack.c.b16 %v988, %v987
        %v995 = vpack.c.b16 %v990, %v989
        %v996 = vpack.c.b16 %v992, %v991
        %v1002 = vsel %vm534, %v967, 0
        %1004 = vmatprep.subr.bf16.mxu0 0
        %1005 = vmatpush1.bf16.msra.mxu0 %v993
        %1006 = vmatprep.subr.bf16.mxu0 0
        %1007 = vmatpush1.bf16.msra.mxu0 %v994
        %1008 = vmatprep.subr.bf16.mxu0 0
        %1009 = vmatpush1.bf16.msra.mxu0 %v995
        %1010 = vmatprep.subr.bf16.mxu0 0
        %1011 = vmatpush1.bf16.msra.mxu0 %v996
        %1012 = vmatprep.subr.bf16.mxu0 0
        %1013 = vmatpush1.bf16.msra.mxu0 0
        %1014 = vmatprep.subr.bf16.mxu0 0
        %1015 = vmatpush1.bf16.msra.mxu0 0
        %1016 = vmatprep.subr.bf16.mxu0 0
        %1017 = vmatpush1.bf16.msra.mxu0 0
        %1018 = vmatprep.subr.bf16.mxu0 0
        %1019 = vmatpush1.bf16.msra.mxu0 0
        %1020 = vmatprep.subr.bf16.mxu0 0
        %1021 = vmatpush1.bf16.msra.mxu0 0
        %1022 = vmatprep.subr.bf16.mxu0 0
        %1023 = vmatpush1.bf16.msra.mxu0 0
        %1024 = vmatprep.subr.bf16.mxu0 0
        %1025 = vmatpush1.bf16.msra.mxu0 0
        %1026 = vmatprep.subr.bf16.mxu0 0
        %1027 = vmatpush1.bf16.msra.mxu0 0
        %1028 = vmatprep.subr.bf16.mxu0 0
        %1029 = vmatpush1.bf16.msra.mxu0 0
        %1030 = vmatprep.subr.bf16.mxu0 0
        %1031 = vmatpush1.bf16.msra.mxu0 0
        %1032 = vmatprep.subr.bf16.mxu0 0
        %1033 = vmatpush1.bf16.msra.mxu0 0
        %1034 = vmatprep.subr.bf16.mxu0 0
        %1035 = vmatpush1.bf16.msra.mxu0 0
        %1036 = vmatprep.mubr.bf16.mxu0 0
        %1037 = vmatmul.mubr.bf16.gmra.mrb[0].mxu0 %v1002
        %v1038 = vpop.f32.mrb[0].mxu0
        %v1039 = vadd.f32 0.0, %v1038
        %v1040 = vpop.f32.mrb[0].mxu0
        %v1041 = vpop.f32.mrb[0].mxu0
        %v1042 = vpop.f32.mrb[0].mxu0
        %1043 = vdwg.mxu0
        %v1052 = vunpack.c.l.b16 %v913
        %v1053 = vunpack.c.l.b16 %v914
        %v1054 = vunpack.c.l.b16 %v915
        %v1055 = vunpack.c.l.b16 %v916
        %v1056 = vunpack.c.l.b16 %v917
        %v1057 = vunpack.c.l.b16 %v918
        %v1058 = vunpack.c.l.b16 %v919
        %v1059 = vunpack.c.l.b16 %v920
        %v1060 = vpack.c.b16 %v1053, %v1052
        %v1061 = vpack.c.b16 %v1055, %v1054
        %v1062 = vpack.c.b16 %v1057, %v1056
        %v1063 = vpack.c.b16 %v1059, %v1058
        %v1069 = vsel %vm534, %v912, 0
        %1071 = vmatprep.subr.bf16.mxu0 0
        %1072 = vmatpush1.bf16.msra.mxu0 %v1060
        %1073 = vmatprep.subr.bf16.mxu0 0
        %1074 = vmatpush1.bf16.msra.mxu0 %v1061
        %1075 = vmatprep.subr.bf16.mxu0 0
        %1076 = vmatpush1.bf16.msra.mxu0 %v1062
        %1077 = vmatprep.subr.bf16.mxu0 0
        %1078 = vmatpush1.bf16.msra.mxu0 %v1063
        %1079 = vmatprep.subr.bf16.mxu0 0
        %1080 = vmatpush1.bf16.msra.mxu0 0
        %1081 = vmatprep.subr.bf16.mxu0 0
        %1082 = vmatpush1.bf16.msra.mxu0 0
        %1083 = vmatprep.subr.bf16.mxu0 0
        %1084 = vmatpush1.bf16.msra.mxu0 0
        %1085 = vmatprep.subr.bf16.mxu0 0
        %1086 = vmatpush1.bf16.msra.mxu0 0
        %1087 = vmatprep.subr.bf16.mxu0 0
        %1088 = vmatpush1.bf16.msra.mxu0 0
        %1089 = vmatprep.subr.bf16.mxu0 0
        %1090 = vmatpush1.bf16.msra.mxu0 0
        %1091 = vmatprep.subr.bf16.mxu0 0
        %1092 = vmatpush1.bf16.msra.mxu0 0
        %1093 = vmatprep.subr.bf16.mxu0 0
        %1094 = vmatpush1.bf16.msra.mxu0 0
        %1095 = vmatprep.subr.bf16.mxu0 0
        %1096 = vmatpush1.bf16.msra.mxu0 0
        %1097 = vmatprep.subr.bf16.mxu0 0
        %1098 = vmatpush1.bf16.msra.mxu0 0
        %1099 = vmatprep.subr.bf16.mxu0 0
        %1100 = vmatpush1.bf16.msra.mxu0 0
        %1101 = vmatprep.subr.bf16.mxu0 0
        %1102 = vmatpush1.bf16.msra.mxu0 0
        %1103 = vmatprep.mubr.bf16.mxu0 0
        %1104 = vmatmul.mubr.bf16.gmra.mrb[0].mxu0 %v1069
        %v1105 = vpop.f32.mrb[0].mxu0
        %v1106 = vadd.f32 %v1039, %v1105
        %v1107 = vpop.f32.mrb[0].mxu0
        %v1108 = vpop.f32.mrb[0].mxu0
        %v1109 = vpop.f32.mrb[0].mxu0
        %1110 = vdwg.mxu0
        %v1111 = vadd.s32 %v393, 1
        %vm1112 = vcmp.eq.s32.totalorder %v395, %v1111
        %v1113 = vsel %vm1112, 1.0, 0.0
        %v1114 = vpack.c.bf16 %v1113, %v1113
        %v1116 = vsel %vm864, %v1114, 0
        %1118 = vmatprep.subr.bf16.mxu0 0
        %1119 = vmatpush1.bf16.msra.mxu0 %v870
        %1120 = vmatprep.subr.bf16.mxu0 0
        %1121 = vmatpush1.bf16.msra.mxu0 0
        %1122 = vmatprep.subr.bf16.mxu0 0
        %1123 = vmatpush1.bf16.msra.mxu0 0
        %1124 = vmatprep.subr.bf16.mxu0 0
        %1125 = vmatpush1.bf16.msra.mxu0 0
        %1126 = vmatprep.subr.bf16.mxu0 0
        %1127 = vmatpush1.bf16.msra.mxu0 0
        %1128 = vmatprep.subr.bf16.mxu0 0
        %1129 = vmatpush1.bf16.msra.mxu0 0
        %1130 = vmatprep.subr.bf16.mxu0 0
        %1131 = vmatpush1.bf16.msra.mxu0 0
        %1132 = vmatprep.subr.bf16.mxu0 0
        %1133 = vmatpush1.bf16.msra.mxu0 0
        %1134 = vmatprep.subr.bf16.mxu0 0
        %1135 = vmatpush1.bf16.msra.mxu0 0
        %1136 = vmatprep.subr.bf16.mxu0 0
        %1137 = vmatpush1.bf16.msra.mxu0 0
        %1138 = vmatprep.subr.bf16.mxu0 0
        %1139 = vmatpush1.bf16.msra.mxu0 0
        %1140 = vmatprep.subr.bf16.mxu0 0
        %1141 = vmatpush1.bf16.msra.mxu0 0
        %1142 = vmatprep.subr.bf16.mxu0 0
        %1143 = vmatpush1.bf16.msra.mxu0 0
        %1144 = vmatprep.subr.bf16.mxu0 0
        %1145 = vmatpush1.bf16.msra.mxu0 0
        %1146 = vmatprep.subr.bf16.mxu0 0
        %1147 = vmatpush1.bf16.msra.mxu0 0
        %1148 = vmatprep.subr.bf16.mxu0 0
        %1149 = vmatpush1.bf16.msra.mxu0 0
        %1150 = vmatprep.mubr.bf16.mxu0 0
        %1151 = vmatmul.mubr.bf16.gmra.mrb[0].mxu0 %v1116
        %v1152 = vpop.f32.mrb[0].mxu0
        %v1153 = vadd.f32 0.0, %v1152
        %v1154 = vpop.f32.mrb[0].mxu0
        %v1155 = vpop.f32.mrb[0].mxu0
        %v1156 = vpop.f32.mrb[0].mxu0
        %1157 = vdwg.mxu0
        %v1158 = vpack.c.bf16 %v1153, %v1153
        %s1159 = scalar_lea.vmem [#allocation7], 64
        %v1160 = vld [vmem:[%s1159] sm:$0xf]
        %v1161 = vld [vmem:[%s1159 + $0x4] sm:$0xf]
        %v1162 = vld [vmem:[%s1159 + $0x8] sm:$0xf]
        %v1163 = vld [vmem:[%s1159 + $0xc] sm:$0xf]
        %v1164 = vld [vmem:[%s1159 + $0x10] sm:$0xf]
        %v1165 = vld [vmem:[%s1159 + $0x14] sm:$0xf]
        %v1166 = vld [vmem:[%s1159 + $0x18] sm:$0xf]
        %v1167 = vld [vmem:[%s1159 + $0x1c] sm:$0xf]
        %v1176 = vunpack.c.l.b16 %v1160
        %v1177 = vunpack.c.l.b16 %v1161
        %v1178 = vunpack.c.l.b16 %v1162
        %v1179 = vunpack.c.l.b16 %v1163
        %v1180 = vunpack.c.l.b16 %v1164
        %v1181 = vunpack.c.l.b16 %v1165
        %v1182 = vunpack.c.l.b16 %v1166
        %v1183 = vunpack.c.l.b16 %v1167
        %v1184 = vpack.c.b16 %v1177, %v1176
        %v1185 = vpack.c.b16 %v1179, %v1178
        %v1186 = vpack.c.b16 %v1181, %v1180
        %v1187 = vpack.c.b16 %v1183, %v1182
        %v1193 = vsel %vm534, %v1158, 0
        %1195 = vmatprep.subr.bf16.mxu0 0
        %1196 = vmatpush1.bf16.msra.mxu0 %v1184
        %1197 = vmatprep.subr.bf16.mxu0 0
        %1198 = vmatpush1.bf16.msra.mxu0 %v1185
        %1199 = vmatprep.subr.bf16.mxu0 0
        %1200 = vmatpush1.bf16.msra.mxu0 %v1186
        %1201 = vmatprep.subr.bf16.mxu0 0
        %1202 = vmatpush1.bf16.msra.mxu0 %v1187
        %1203 = vmatprep.subr.bf16.mxu0 0
        %1204 = vmatpush1.bf16.msra.mxu0 0
        %1205 = vmatprep.subr.bf16.mxu0 0
        %1206 = vmatpush1.bf16.msra.mxu0 0
        %1207 = vmatprep.subr.bf16.mxu0 0
        %1208 = vmatpush1.bf16.msra.mxu0 0
        %1209 = vmatprep.subr.bf16.mxu0 0
        %1210 = vmatpush1.bf16.msra.mxu0 0
        %1211 = vmatprep.subr.bf16.mxu0 0
        %1212 = vmatpush1.bf16.msra.mxu0 0
        %1213 = vmatprep.subr.bf16.mxu0 0
        %1214 = vmatpush1.bf16.msra.mxu0 0
        %1215 = vmatprep.subr.bf16.mxu0 0
        %1216 = vmatpush1.bf16.msra.mxu0 0
        %1217 = vmatprep.subr.bf16.mxu0 0
        %1218 = vmatpush1.bf16.msra.mxu0 0
        %1219 = vmatprep.subr.bf16.mxu0 0
        %1220 = vmatpush1.bf16.msra.mxu0 0
        %1221 = vmatprep.subr.bf16.mxu0 0
        %1222 = vmatpush1.bf16.msra.mxu0 0
        %1223 = vmatprep.subr.bf16.mxu0 0
        %1224 = vmatpush1.bf16.msra.mxu0 0
        %1225 = vmatprep.subr.bf16.mxu0 0
        %1226 = vmatpush1.bf16.msra.mxu0 0
        %1227 = vmatprep.mubr.bf16.mxu0 0
        %1228 = vmatmul.mubr.bf16.gmra.mrb[0].mxu0 %v1193
        %v1229 = vpop.f32.mrb[0].mxu0
        %v1230 = vadd.f32 0.0, %v1229
        %v1231 = vpop.f32.mrb[0].mxu0
        %v1232 = vpop.f32.mrb[0].mxu0
        %v1233 = vpop.f32.mrb[0].mxu0
        %1234 = vdwg.mxu0
        %v1235 = vadd.f32 %v1106, %v1230
        %v1236 = vadd.f32 %v1235, %v712
        %1237 = vst.msk [vmem:[%s367] sm:$0xff] %vm534, %v1236
        %s1238 = sand.u32 %s208, 1
        %s1239 = scalar_lea.sflag [#allocation4], %s1238
        %s1240 = sand.u32 %s208, 1
        %s1241 = smul.addr %s1240, 8
        %s1242 = scalar_lea.vmem [#allocation10], %s1241
        // Predicated region
        $region69: #{tpu_custom_call.1} parent=51 // pred_check
          %p1243 = pneg %p218
        $region70: #{tpu_custom_call.1} parent=51 // pred_check_branch
          %1245 = sbr.rel (%p1243) target = $region72
        $region71: #{tpu_custom_call.1} parent=51 // pred_region
          %s1247 = ssub.s32 128, 128
          %1248 = vsyncadd %s1239, %s1247
          %s1249 = smul.addr %s27, 128
          %s1250 = scalar_lea.hbm %s8, %s1249
          %s1252 = sshll.u32 %s1242, 4
          %s1253 = int_to_ptr.vmem [resolvable:$true] %s1252
          %1255 = dma.vmem_to_hbm [thread:$0]  %s1253, 128, %s1250, %s1239
        $region72: #{tpu_custom_call.1} parent=51 // pred_fallthru
          _
      $region52: #{tpu_custom_call.1} parent=5 // pred_fallthru
        _
      %p1256 = scmp.le.s32.totalorder 2, %s22
      // Predicated region
      $region73: #{tpu_custom_call.1} parent=5 // pred_check
        %p1257 = pneg %p1256
      $region74: #{tpu_custom_call.1} parent=5 // pred_check_branch
        %1259 = sbr.rel (%p1257) target = $region76
      $region75: #{tpu_custom_call.1} parent=5 // pred_region
        %s1260 = ssub.s32 %s22, 2
        // Predicated region
        $region77: #{tpu_custom_call.1} parent=75 // pred_check
          %p1261 = pneg %p224
        $region78: #{tpu_custom_call.1} parent=75 // pred_check_branch
          %1263 = sbr.rel (%p1261) target = $region80
        $region79: #{tpu_custom_call.1} parent=75 // pred_region
          %s1264 = sand.u32 %s209, 1
          %s1265 = scalar_lea.sflag [#allocation4], %s1264
          %s1266 = sand.u32 %s209, 1
          %s1267 = smul.addr %s1266, 8
          %s1268 = scalar_lea.vmem [#allocation10], %s1267
          %1269 = dma.done %s1265, 128
        $region80: #{tpu_custom_call.1} parent=75 // pred_fallthru
          _
      $region76: #{tpu_custom_call.1} parent=5 // pred_fallthru
        _
    $region6: #{tpu_custom_call.1} parent=1 // loop_footer
      %s26 = sadd.s32 1, %s22
    $region7: #{tpu_custom_call.1} parent=1 // loop_footer_branch
      %21 = sbr.rel target = $region3
    $region8: #{tpu_custom_call.1} parent=1 // loop_exit
      _
    %1270 = vsyncpa [#allocation3], 1
    %s1271 = scalar_lea.sflag [#allocation3], 1
    %1272 = vsyncpa %s1271, 1
    %1273 = vsyncpa [#allocation6], 1
    %1274 = vsyncpa [#allocation9], 1
    %1275 = vsyncpa [#allocation4], 1
    %s1276 = scalar_lea.sflag [#allocation4], 1
    %1277 = vsyncpa %s1276, 1

</llo_original>
